<compile_context>
chip_gen: v7x
topology: tpu7x:2x2x1
jax: 0.10.0
libtpu: 0.0.40
codegen_flags: <defaults>
</compile_context>

<pallas_src>
import functools

import jax
import jax.numpy as jnp
from jax.experimental import pallas as pl
from jax.experimental.pallas import tpu as pltpu

_VMEM_LIMIT = 32 * 1024 * 1024  # safe scoped-VMEM limit on v5e/v6e/v7x


# ----------------------------------------------------------------------------
# helpers
# ----------------------------------------------------------------------------
def _round_up(x, m):
    return ((x + m - 1) // m) * m


def _pad2d(x, rows, cols):
    r, c = x.shape
    if (r, c) == (rows, cols):
        return x
    return jnp.pad(x, ((0, rows - r), (0, cols - c)))


# ----------------------------------------------------------------------------
# Pallas kernels
# ----------------------------------------------------------------------------
def _mm_kernel(*refs, activation, has_bias, has_residual):
    """Tiled matmul with f32 accumulator and fused bias/activation/residual."""
    a_ref, b_ref = refs[0], refs[1]
    pos = 2
    bias_ref = None
    res_ref = None
    if has_bias:
        bias_ref = refs[pos]
        pos += 1
    if has_residual:
        res_ref = refs[pos]
        pos += 1
    o_ref, acc_ref = refs[pos], refs[pos + 1]

    @pl.when(pl.program_id(2) == 0)
    def _init():
        acc_ref[...] = jnp.zeros_like(acc_ref)

    # Operands stay in their native dtype (bf16 feeds MXU at full rate);
    # accumulate in f32.
    acc_ref[...] += jnp.dot(a_ref[...], b_ref[...],
                            preferred_element_type=jnp.float32)

    @pl.when(pl.program_id(2) == pl.num_programs(2) - 1)
    def _finalize():
        acc = acc_ref[...]
        if has_bias:
            acc = acc + bias_ref[...].astype(jnp.float32)
        if activation == "quick_gelu":
            acc = acc * jax.nn.sigmoid(1.702 * acc)  # CLIP QuickGELU (f32 epilogue)
        if has_residual:
            acc = acc + res_ref[...].astype(jnp.float32)
        o_ref[...] = acc.astype(o_ref.dtype)


def _ln_mm_kernel(x_ref, g_ref, bta_ref, w_ref, bias_ref, o_ref, *,
                  eps, activation):
    """Fused LayerNorm (over full feature dim) + matmul + bias (+QuickGELU)."""
    x = x_ref[...].astype(jnp.float32)  # LN statistics in f32
    mean = jnp.mean(x, axis=-1, keepdims=True)
    var = jnp.mean(jnp.square(x - mean), axis=-1, keepdims=True)
    xn = (x - mean) * jax.lax.rsqrt(var + eps)
    xn = xn * g_ref[...].astype(jnp.float32) + bta_ref[...].astype(jnp.float32)
    acc = jnp.dot(xn.astype(w_ref.dtype), w_ref[...],
                  preferred_element_type=jnp.float32)
    acc = acc + bias_ref[...].astype(jnp.float32)
    if activation == "quick_gelu":
        acc = acc * jax.nn.sigmoid(1.702 * acc)
    o_ref[...] = acc.astype(o_ref.dtype)


def _ln_kernel(x_ref, g_ref, b_ref, o_ref, *, eps):
    x = x_ref[...].astype(jnp.float32)
    mean = jnp.mean(x, axis=-1, keepdims=True)
    var = jnp.mean(jnp.square(x - mean), axis=-1, keepdims=True)
    y = (x - mean) * jax.lax.rsqrt(var + eps)
    y = y * g_ref[...].astype(jnp.float32) + b_ref[...].astype(jnp.float32)
    o_ref[...] = y.astype(o_ref.dtype)


def _attn_kernel(q_ref, k_ref, v_ref, o_ref, *, scale):
    """Single-head attention (one (batch, head) pair per grid step)."""
    q = q_ref[0] * scale                         # fold scale into q: O(S*Dh)
    k = k_ref[0]
    v = v_ref[0]
    s = jax.lax.dot_general(q, k, (((1,), (1,)), ((), ())),
                            preferred_element_type=jnp.float32)   # (S, S)
    s = s - jnp.max(s, axis=-1, keepdims=True)
    p = jnp.exp(s)
    denom = jnp.sum(p, axis=-1, keepdims=True)
    p = p * pl.reciprocal(denom, approx=True)    # divide on the EUP slot
    o = jnp.dot(p.astype(v.dtype), v, preferred_element_type=jnp.float32)
    o_ref[0] = o.astype(o_ref.dtype)
    # TODO(synk): for very long sequences (S >> 1024) switch to flash-style
    # KV-block tiling with online-softmax m/l/acc scratch; ViT S<=~260 fits.


# ----------------------------------------------------------------------------
# Pallas wrappers
# ----------------------------------------------------------------------------
def pallas_matmul(a, b, bias=None, residual=None, activation=None,
                  tm=256, tn=512, tk=512):
    """out = activation(a @ b + bias) + residual   (bias/residual optional)."""
    M, K = a.shape
    K2, N = b.shape
    assert K == K2
    tm, tn, tk = min(tm, M), min(tn, N), min(tk, K)
    Mp, Np, Kp = _round_up(M, tm), _round_up(N, tn), _round_up(K, tk)

    inputs = [_pad2d(a, Mp, Kp), _pad2d(b, Kp, Np)]
    in_specs = [
        pl.BlockSpec((tm, tk), lambda i, j, k: (i, k)),
        pl.BlockSpec((tk, tn), lambda i, j, k: (k, j)),
    ]
    if bias is not None:
        inputs.append(_pad2d(bias.reshape(1, N), 1, Np))
        in_specs.append(pl.BlockSpec((1, tn), lambda i, j, k: (0, j)))
    if residual is not None:
        inputs.append(_pad2d(residual, Mp, Np))
        in_specs.append(pl.BlockSpec((tm, tn), lambda i, j, k: (i, j)))

    kernel = functools.partial(_mm_kernel, activation=activation,
                               has_bias=bias is not None,
                               has_residual=residual is not None)
    out = pl.pallas_call(
        kernel,
        out_shape=jax.ShapeDtypeStruct((Mp, Np), a.dtype),
        grid=(Mp // tm, Np // tn, Kp // tk),
        in_specs=in_specs,
        out_specs=pl.BlockSpec((tm, tn), lambda i, j, k: (i, j)),
        scratch_shapes=[pltpu.VMEM((tm, tn), jnp.float32)],
        compiler_params=pltpu.CompilerParams(
            dimension_semantics=("parallel", "parallel", "arbitrary"),
            vmem_limit_bytes=_VMEM_LIMIT),
    )(*inputs)
    if (Mp, Np) != (M, N):
        out = out[:M, :N]
    return out


def pallas_ln_matmul(x, gamma, beta, w, bias, activation=None, eps=1e-5,
                     tm=256, tn=512):
    """out = activation(LayerNorm(x) @ w + bias).  Feature dim is not tiled."""
    M, K = x.shape
    K2, N = w.shape
    assert K == K2
    tm, tn = min(tm, M), min(tn, N)
    Mp, Np = _round_up(M, tm), _round_up(N, tn)

    kernel = functools.partial(_ln_mm_kernel, eps=eps, activation=activation)
    out = pl.pallas_call(
        kernel,
        out_shape=jax.ShapeDtypeStruct((Mp, Np), x.dtype),
        grid=(Mp // tm, Np // tn),
        in_specs=[
            pl.BlockSpec((tm, K), lambda i, j: (i, 0)),
            pl.BlockSpec((1, K), lambda i, j: (0, 0)),
            pl.BlockSpec((1, K), lambda i, j: (0, 0)),
            pl.BlockSpec((K, tn), lambda i, j: (0, j)),
            pl.BlockSpec((1, tn), lambda i, j: (0, j)),
        ],
        out_specs=pl.BlockSpec((tm, tn), lambda i, j: (i, j)),
        compiler_params=pltpu.CompilerParams(
            dimension_semantics=("parallel", "parallel"),
            vmem_limit_bytes=_VMEM_LIMIT),
    )(_pad2d(x, Mp, K), gamma.reshape(1, K), beta.reshape(1, K),
      _pad2d(w, K, Np), _pad2d(bias.reshape(1, N), 1, Np))
    if (Mp, Np) != (M, N):
        out = out[:M, :N]
    return out


def pallas_layernorm(x, gamma, beta, eps=1e-5, tm=512):
    """Row-tiled LayerNorm over the last dim of a (rows, D) slab."""
    M, D = x.shape
    tm = min(tm, M)
    Mp = _round_up(M, tm)
    out = pl.pallas_call(
        functools.partial(_ln_kernel, eps=eps),
        out_shape=jax.ShapeDtypeStruct((Mp, D), x.dtype),
        grid=(Mp // tm,),
        in_specs=[
            pl.BlockSpec((tm, D), lambda i: (i, 0)),
            pl.BlockSpec((1, D), lambda i: (0, 0)),
            pl.BlockSpec((1, D), lambda i: (0, 0)),
        ],
        out_specs=pl.BlockSpec((tm, D), lambda i: (i, 0)),
        compiler_params=pltpu.CompilerParams(
            dimension_semantics=("parallel",),
            vmem_limit_bytes=_VMEM_LIMIT),
    )(_pad2d(x, Mp, D), gamma.reshape(1, D), beta.reshape(1, D))
    return out[:M] if Mp != M else out


def pallas_attention(q, k, v, scale):
    """q,k,v: (B*H, S, Dh) -> softmax(q k^T * scale) v, one head per grid step."""
    BH, S, Dh = q.shape
    spec = pl.BlockSpec((1, S, Dh), lambda b: (b, 0, 0))
    return pl.pallas_call(
        functools.partial(_attn_kernel, scale=scale),
        out_shape=jax.ShapeDtypeStruct((BH, S, Dh), q.dtype),
        grid=(BH,),
        in_specs=[spec, spec, spec],
        out_specs=spec,
        compiler_params=pltpu.CompilerParams(
            dimension_semantics=("parallel",),
            vmem_limit_bytes=_VMEM_LIMIT),
    )(q, k, v)


# ----------------------------------------------------------------------------
# Parameters (weights stored pre-packed in the layout the kernels consume)
# ----------------------------------------------------------------------------
def init_params(key, *, in_channels, width, patch_size, grid, layers, heads):
    num_tokens = grid * grid + 1
    ks = jax.random.split(key, 4 + layers)
    std = 0.02

    def nrm(k, shape):
        return jax.random.normal(k, shape, jnp.float32) * std

    params = {
        # == torch conv1.weight (width, C, P, P) reshaped to (C*P*P, width)
        "conv1_w_mat": nrm(ks[0], (width, in_channels, patch_size, patch_size)
                           ).reshape(width, -1).T,
        "class_embedding": nrm(ks[1], (width,)),
        "positional_embedding": nrm(ks[2], (num_tokens, width)),
        "ln_pre_g": jnp.ones((width,), jnp.float32),
        "ln_pre_b": jnp.zeros((width,), jnp.float32),
        "ln_post_g": jnp.ones((width,), jnp.float32),
        "ln_post_b": jnp.zeros((width,), jnp.float32),
        "blocks": [],
    }
    for l in range(layers):
        bk = jax.random.split(ks[4 + l], 6)
        params["blocks"].append({
            "ln1_g": jnp.ones((width,), jnp.float32),
            "ln1_b": jnp.zeros((width,), jnp.float32),
            # == torch MHA in_proj_weight.T  (width, 3*width): cols = [q|k|v]
            "in_proj_w_t": nrm(bk[0], (width, 3 * width)),
            "in_proj_b": nrm(bk[1], (3 * width,)),
            # == torch out_proj.weight.T  (width, width)
            "out_proj_w_t": nrm(bk[2], (width, width)),
            "out_proj_b": nrm(bk[3], (width,)),
            "ln2_g": jnp.ones((width,), jnp.float32),
            "ln2_b": jnp.zeros((width,), jnp.float32),
            # == torch mlp.c_fc.weight.T / mlp.c_proj.weight.T
            "fc1_w_t": nrm(bk[4], (width, 4 * width)),
            "fc1_b": jnp.zeros((4 * width,), jnp.float32),
            "fc2_w_t": nrm(bk[5], (4 * width, width)),
            "fc2_b": jnp.zeros((width,), jnp.float32),
        })
    return params


# ----------------------------------------------------------------------------
# Model forward (layout glue in JAX, all compute in Pallas)
# ----------------------------------------------------------------------------
def pacl_vision_encoder(x, params, *, patch_size, heads):
    """x: (B, C, H, W) NCHW (PyTorch layout). Returns (B, grid*grid, width)."""
    B, C, H, W = x.shape
    P = patch_size
    gh, gw = H // P, W // P
    width = params["conv1_w_mat"].shape[1]
    head_dim = width // heads
    scale = float(1.0 / (head_dim ** 0.5))

    # ---- conv1 (stride=P, kernel=P, no bias) as exact im2col + tiled matmul --
    patches = x.reshape(B, C, gh, P, gw, P)
    patches = jnp.transpose(patches, (0, 2, 4, 1, 3, 5))        # (B,gh,gw,C,P,P)
    patches = patches.reshape(B * gh * gw, C * P * P)
    x_emb = pallas_matmul(patches, params["conv1_w_mat"])       # (B*gh*gw, width)
    x_seq = x_emb.reshape(B, gh * gw, width)

    # ---- class token + positional embedding (cheap startup glue) ----
    cls = jnp.broadcast_to(params["class_embedding"].reshape(1, 1, width),
                           (B, 1, width))
    x_seq = jnp.concatenate([cls, x_seq], axis=1)               # (B, S, width)
    x_seq = x_seq + params["positional_embedding"][None, :, :]
    S = x_seq.shape[1]

    # ---- ln_pre ----
    x2d = pallas_layernorm(x_seq.reshape(B * S, width),
                           params["ln_pre_g"], params["ln_pre_b"])

    # ---- transformer (ResidualAttentionBlocks) ----
    def to_heads(t):  # (B*S, width) col-slice h -> (B*H, S, Dh)
        return jnp.transpose(t.reshape(B, S, heads, head_dim),
                             (0, 2, 1, 3)).reshape(B * heads, S, head_dim)

    for blk in params["blocks"]:
        # attention branch: ln_1 fused into the QKV matmul
        qkv = pallas_ln_matmul(x2d, blk["ln1_g"], blk["ln1_b"],
                               blk["in_proj_w_t"], blk["in_proj_b"])
        qkv = qkv.reshape(B, S, 3 * width).reshape(B * S, 3 * width)
        q, k, v = jnp.split(qkv, 3, axis=-1)
        attn = pallas_attention(to_heads(q), to_heads(k), to_heads(v), scale)
        attn = jnp.transpose(attn.reshape(B, heads, S, head_dim),
                             (0, 2, 1, 3)).reshape(B * S, width)
        # out_proj with bias + residual fused into the matmul epilogue
        x2d = pallas_matmul(attn, blk["out_proj_w_t"], bias=blk["out_proj_b"],
                            residual=x2d)

        # MLP branch: ln_2 + QuickGELU fused into fc1; residual fused into fc2
        h2d = pallas_ln_matmul(x2d, blk["ln2_g"], blk["ln2_b"],
                               blk["fc1_w_t"], blk["fc1_b"],
                               activation="quick_gelu")
        x2d = pallas_matmul(h2d, blk["fc2_w_t"], bias=blk["fc2_b"],
                            residual=x2d)

    # ---- ln_post on patch tokens only (drop the class token) ----
    x_seq = x2d.reshape(B, S, width)
    patch_tokens = x_seq[:, 1:, :].reshape(B * (S - 1), width)
    out = pallas_layernorm(patch_tokens, params["ln_post_g"],
                           params["ln_post_b"]).reshape(B, S - 1, width)
    return out


# ----------------------------------------------------------------------------
if __name__ == "__main__":
    # Small CLIP-like config: 16x16 image, patch 8 -> 2x2 grid, width 32,
    # 4 heads, 2 transformer layers.
    B, C, H, W = 2, 3, 16, 16
    PATCH = 8
    WIDTH = 32
    HEADS = 4
    LAYERS = 2
    GRID = H // PATCH

    key = jax.random.PRNGKey(0)
    k_x, k_p = jax.random.split(key)
    x = jax.random.normal(k_x, (B, C, H, W), jnp.float32)   # NCHW, like PyTorch
    params = init_params(k_p, in_channels=C, width=WIDTH, patch_size=PATCH,
                         grid=GRID, layers=LAYERS, heads=HEADS)

    fwd = jax.jit(lambda xx, pp: pacl_vision_encoder(
        xx, pp, patch_size=PATCH, heads=HEADS))
    out = fwd(x, params)
    out = jax.block_until_ready(out)
    assert out.shape == (B, GRID * GRID, WIDTH), out.shape
    assert bool(jnp.all(jnp.isfinite(out)))
    print("KERNEL_OK")
</pallas_src>

<mosaic_0001>
module attributes {stable_mosaic.version = 11 : i64} {
  func.func @_mm_kernel(%arg0: i32, %arg1: i32, %arg2: i32, %arg3: memref<8x192xf32, #tpu.memory_space<vmem>>, %arg4: memref<192x32xf32, #tpu.memory_space<vmem>>, %arg5: memref<8x32xf32, #tpu.memory_space<vmem>>, %arg6: memref<8x32xf32, #tpu.memory_space<vmem>>) attributes {dimension_semantics = [#tpu.dimension_semantics<parallel>, #tpu.dimension_semantics<parallel>, #tpu.dimension_semantics<arbitrary>], iteration_bounds = array<i64: 1, 1, 1>, scalar_prefetch = 0 : i64, scratch_operands = 1 : i64, tpu.core_type = #tpu.core_type<tc>, window_params = [{transform_indices = @transform_0, window_bounds = array<i64: 8, 192>}, {transform_indices = @transform_1, window_bounds = array<i64: 192, 32>}, {transform_indices = @transform_2, window_bounds = array<i64: 8, 32>}]} {
    %c0_i32 = arith.constant 0 : i32
    %0 = arith.cmpi eq, %arg2, %c0_i32 : i32
    %1 = arith.extui %0 : i1 to i32
    %c0_i32_0 = arith.constant 0 : i32
    %2 = arith.cmpi ne, %1, %c0_i32_0 : i32
    scf.if %2 {
      %cst_10 = arith.constant 0.000000e+00 : f32
      %12 = vector.broadcast %cst_10 : f32 to vector<8x32xf32>
      %c0_11 = arith.constant 0 : index
      %c0_12 = arith.constant 0 : index
      %13 = vector.load %arg6[%c0_11, %c0_12] : memref<8x32xf32, #tpu.memory_space<vmem>>, vector<8x32xf32>
      tpu.vector_store %arg6[%c0_11, %c0_12], %12 {strides = array<i32>} : memref<8x32xf32, #tpu.memory_space<vmem>>, vector<8x32xf32>,
    } else {
    }
    %c0 = arith.constant 0 : index
    %c0_1 = arith.constant 0 : index
    %3 = vector.load %arg6[%c0, %c0_1] : memref<8x32xf32, #tpu.memory_space<vmem>>, vector<8x32xf32>
    %c0_2 = arith.constant 0 : index
    %c0_3 = arith.constant 0 : index
    %4 = vector.load %arg3[%c0_2, %c0_3] : memref<8x192xf32, #tpu.memory_space<vmem>>, vector<8x192xf32>
    %c0_4 = arith.constant 0 : index
    %c0_5 = arith.constant 0 : index
    %5 = vector.load %arg4[%c0_4, %c0_5] : memref<192x32xf32, #tpu.memory_space<vmem>>, vector<192x32xf32>
    %cst = arith.constant dense<0.000000e+00> : vector<8x32xf32>
    %6 = tpu.matmul %4, %5, %cst {dimension_numbers = #tpu.dot_dimension_numbers<[1], [0], [0], [1], [0, 0, 1, 1], [], []>} : vector<8x192xf32>, vector<192x32xf32>, vector<8x32xf32> -> vector<8x32xf32>
    %7 = arith.addf %3, %6 : vector<8x32xf32>
    %c0_6 = arith.constant 0 : index
    %c0_7 = arith.constant 0 : index
    %8 = vector.load %arg6[%c0_6, %c0_7] : memref<8x32xf32, #tpu.memory_space<vmem>>, vector<8x32xf32>
    tpu.vector_store %arg6[%c0_6, %c0_7], %7 {strides = array<i32>} : memref<8x32xf32, #tpu.memory_space<vmem>>, vector<8x32xf32>,
    %c0_i32_8 = arith.constant 0 : i32
    %9 = arith.cmpi eq, %arg2, %c0_i32_8 : i32
    %10 = arith.extui %9 : i1 to i32
    %c0_i32_9 = arith.constant 0 : i32
    %11 = arith.cmpi ne, %10, %c0_i32_9 : i32
    scf.if %11 {
      %c0_10 = arith.constant 0 : index
      %c0_11 = arith.constant 0 : index
      %12 = vector.load %arg6[%c0_10, %c0_11] : memref<8x32xf32, #tpu.memory_space<vmem>>, vector<8x32xf32>
      %c0_12 = arith.constant 0 : index
      %c0_13 = arith.constant 0 : index
      %13 = vector.load %arg5[%c0_12, %c0_13] : memref<8x32xf32, #tpu.memory_space<vmem>>, vector<8x32xf32>
      tpu.vector_store %arg5[%c0_12, %c0_13], %12 {strides = array<i32>} : memref<8x32xf32, #tpu.memory_space<vmem>>, vector<8x32xf32>,
    } else {
    }
    return
  }
  func.func @transform_0(%arg0: i32, %arg1: i32, %arg2: i32) -> (i32, i32) {
    %c0_i32 = arith.constant 0 : i32
    return %arg0, %arg2 : i32, i32
  }
  func.func @transform_1(%arg0: i32, %arg1: i32, %arg2: i32) -> (i32, i32) {
    %c0_i32 = arith.constant 0 : i32
    return %arg2, %arg1 : i32, i32
  }
  func.func @transform_2(%arg0: i32, %arg1: i32, %arg2: i32) -> (i32, i32) {
    %c0_i32 = arith.constant 0 : i32
    return %arg0, %arg1 : i32, i32
  }
}

module attributes {stable_mosaic.version = 11 : i64} {
  func.func @_ln_kernel(%arg0: i32, %arg1: memref<10x32xf32, #tpu.memory_space<vmem>>, %arg2: memref<1x32xf32, #tpu.memory_space<vmem>>, %arg3: memref<1x32xf32, #tpu.memory_space<vmem>>, %arg4: memref<10x32xf32, #tpu.memory_space<vmem>>) attributes {dimension_semantics = [#tpu.dimension_semantics<parallel>], iteration_bounds = array<i64: 1>, scalar_prefetch = 0 : i64, scratch_operands = 0 : i64, tpu.core_type = #tpu.core_type<tc>, window_params = [{transform_indices = @transform_0, window_bounds = array<i64: 10, 32>}, {pipeline_mode = #tpu.pipeline_mode<synchronous>, transform_indices = @transform_1, window_bounds = array<i64: 1, 32>}, {pipeline_mode = #tpu.pipeline_mode<synchronous>, transform_indices = @transform_2, window_bounds = array<i64: 1, 32>}, {transform_indices = @transform_3, window_bounds = array<i64: 10, 32>}]} {
    %c0 = arith.constant 0 : index
    %c0_0 = arith.constant 0 : index
    %0 = vector.load %arg1[%c0, %c0_0] : memref<10x32xf32, #tpu.memory_space<vmem>>, vector<10x32xf32>
    %cst = arith.constant dense<0.000000e+00> : vector<10xf32>
    %1 = vector.multi_reduction <add>, %0, %cst [1] : vector<10x32xf32> to vector<10xf32>
    %2 = vector.shape_cast %1 : vector<10xf32> to vector<10x1xf32>
    %cst_1 = arith.constant 3.200000e+01 : f32
    %3 = vector.broadcast %cst_1 : f32 to vector<10x1xf32>
    %4 = arith.divf %2, %3 : vector<10x1xf32>
    %5 = vector.broadcast %4 : vector<10x1xf32> to vector<10x32xf32>
    %6 = arith.subf %0, %5 : vector<10x32xf32>
    %7 = arith.mulf %6, %6 : vector<10x32xf32>
    %cst_2 = arith.constant dense<0.000000e+00> : vector<10xf32>
    %8 = vector.multi_reduction <add>, %7, %cst_2 [1] : vector<10x32xf32> to vector<10xf32>
    %9 = vector.shape_cast %8 : vector<10xf32> to vector<10x1xf32>
    %cst_3 = arith.constant 3.200000e+01 : f32
    %10 = vector.broadcast %cst_3 : f32 to vector<10x1xf32>
    %11 = arith.divf %9, %10 : vector<10x1xf32>
    %12 = vector.broadcast %4 : vector<10x1xf32> to vector<10x32xf32>
    %13 = arith.subf %0, %12 : vector<10x32xf32>
    %cst_4 = arith.constant 9.99999974E-6 : f32
    %14 = vector.broadcast %cst_4 : f32 to vector<10x1xf32>
    %15 = arith.addf %11, %14 : vector<10x1xf32>
    %16 = math.rsqrt %15 : vector<10x1xf32>
    %17 = vector.broadcast %16 : vector<10x1xf32> to vector<10x32xf32>
    %18 = arith.mulf %13, %17 : vector<10x32xf32>
    %c0_5 = arith.constant 0 : index
    %c0_6 = arith.constant 0 : index
    %19 = vector.load %arg2[%c0_5, %c0_6] : memref<1x32xf32, #tpu.memory_space<vmem>>, vector<1x32xf32>
    %20 = vector.broadcast %19 : vector<1x32xf32> to vector<10x32xf32>
    %21 = arith.mulf %18, %20 : vector<10x32xf32>
    %c0_7 = arith.constant 0 : index
    %c0_8 = arith.constant 0 : index
    %22 = vector.load %arg3[%c0_7, %c0_8] : memref<1x32xf32, #tpu.memory_space<vmem>>, vector<1x32xf32>
    %23 = vector.broadcast %22 : vector<1x32xf32> to vector<10x32xf32>
    %24 = arith.addf %21, %23 : vector<10x32xf32>
    %c0_9 = arith.constant 0 : index
    %c0_10 = arith.constant 0 : index
    %25 = vector.load %arg4[%c0_9, %c0_10] : memref<10x32xf32, #tpu.memory_space<vmem>>, vector<10x32xf32>
    tpu.vector_store %arg4[%c0_9, %c0_10], %24 {strides = array<i32>} : memref<10x32xf32, #tpu.memory_space<vmem>>, vector<10x32xf32>,
    return
  }
  func.func @transform_0(%arg0: i32) -> (i32, i32) {
    %c0_i32 = arith.constant 0 : i32
    %c0_i32_0 = arith.constant 0 : i32
    return %arg0, %c0_i32 : i32, i32
  }
  func.func @transform_1(%arg0: i32) -> (i32, i32) {
    %c0_i32 = arith.constant 0 : i32
    %c0_i32_0 = arith.constant 0 : i32
    %c0_i32_1 = arith.constant 0 : i32
    return %c0_i32, %c0_i32_0 : i32, i32
  }
  func.func @transform_2(%arg0: i32) -> (i32, i32) {
    %c0_i32 = arith.constant 0 : i32
    %c0_i32_0 = arith.constant 0 : i32
    %c0_i32_1 = arith.constant 0 : i32
    return %c0_i32, %c0_i32_0 : i32, i32
  }
  func.func @transform_3(%arg0: i32) -> (i32, i32) {
    %c0_i32 = arith.constant 0 : i32
    %c0_i32_0 = arith.constant 0 : i32
    return %arg0, %c0_i32 : i32, i32
  }
}

module attributes {stable_mosaic.version = 11 : i64} {
  func.func @_ln_mm_kernel(%arg0: i32, %arg1: i32, %arg2: memref<10x32xf32, #tpu.memory_space<vmem>>, %arg3: memref<1x32xf32, #tpu.memory_space<vmem>>, %arg4: memref<1x32xf32, #tpu.memory_space<vmem>>, %arg5: memref<32x96xf32, #tpu.memory_space<vmem>>, %arg6: memref<1x96xf32, #tpu.memory_space<vmem>>, %arg7: memref<10x96xf32, #tpu.memory_space<vmem>>) attributes {dimension_semantics = [#tpu.dimension_semantics<parallel>, #tpu.dimension_semantics<parallel>], iteration_bounds = array<i64: 1, 1>, scalar_prefetch = 0 : i64, scratch_operands = 0 : i64, tpu.core_type = #tpu.core_type<tc>, window_params = [{transform_indices = @transform_0, window_bounds = array<i64: 10, 32>}, {pipeline_mode = #tpu.pipeline_mode<synchronous>, transform_indices = @transform_1, window_bounds = array<i64: 1, 32>}, {pipeline_mode = #tpu.pipeline_mode<synchronous>, transform_indices = @transform_2, window_bounds = array<i64: 1, 32>}, {transform_indices = @transform_3, window_bounds = array<i64: 32, 96>}, {transform_indices = @transform_4, window_bounds = array<i64: 1, 96>}, {transform_indices = @transform_5, window_bounds = array<i64: 10, 96>}]} {
    %c0 = arith.constant 0 : index
    %c0_0 = arith.constant 0 : index
    %0 = vector.load %arg2[%c0, %c0_0] : memref<10x32xf32, #tpu.memory_space<vmem>>, vector<10x32xf32>
    %cst = arith.constant dense<0.000000e+00> : vector<10xf32>
    %1 = vector.multi_reduction <add>, %0, %cst [1] : vector<10x32xf32> to vector<10xf32>
    %2 = vector.shape_cast %1 : vector<10xf32> to vector<10x1xf32>
    %cst_1 = arith.constant 3.200000e+01 : f32
    %3 = vector.broadcast %cst_1 : f32 to vector<10x1xf32>
    %4 = arith.divf %2, %3 : vector<10x1xf32>
    %5 = vector.broadcast %4 : vector<10x1xf32> to vector<10x32xf32>
    %6 = arith.subf %0, %5 : vector<10x32xf32>
    %7 = arith.mulf %6, %6 : vector<10x32xf32>
    %cst_2 = arith.constant dense<0.000000e+00> : vector<10xf32>
    %8 = vector.multi_reduction <add>, %7, %cst_2 [1] : vector<10x32xf32> to vector<10xf32>
    %9 = vector.shape_cast %8 : vector<10xf32> to vector<10x1xf32>
    %cst_3 = arith.constant 3.200000e+01 : f32
    %10 = vector.broadcast %cst_3 : f32 to vector<10x1xf32>
    %11 = arith.divf %9, %10 : vector<10x1xf32>
    %12 = vector.broadcast %4 : vector<10x1xf32> to vector<10x32xf32>
    %13 = arith.subf %0, %12 : vector<10x32xf32>
    %cst_4 = arith.constant 9.99999974E-6 : f32
    %14 = vector.broadcast %cst_4 : f32 to vector<10x1xf32>
    %15 = arith.addf %11, %14 : vector<10x1xf32>
    %16 = math.rsqrt %15 : vector<10x1xf32>
    %17 = vector.broadcast %16 : vector<10x1xf32> to vector<10x32xf32>
    %18 = arith.mulf %13, %17 : vector<10x32xf32>
    %c0_5 = arith.constant 0 : index
    %c0_6 = arith.constant 0 : index
    %19 = vector.load %arg3[%c0_5, %c0_6] : memref<1x32xf32, #tpu.memory_space<vmem>>, vector<1x32xf32>
    %20 = vector.broadcast %19 : vector<1x32xf32> to vector<10x32xf32>
    %21 = arith.mulf %18, %20 : vector<10x32xf32>
    %c0_7 = arith.constant 0 : index
    %c0_8 = arith.constant 0 : index
    %22 = vector.load %arg4[%c0_7, %c0_8] : memref<1x32xf32, #tpu.memory_space<vmem>>, vector<1x32xf32>
    %23 = vector.broadcast %22 : vector<1x32xf32> to vector<10x32xf32>
    %24 = arith.addf %21, %23 : vector<10x32xf32>
    %c0_9 = arith.constant 0 : index
    %c0_10 = arith.constant 0 : index
    %25 = vector.load %arg5[%c0_9, %c0_10] : memref<32x96xf32, #tpu.memory_space<vmem>>, vector<32x96xf32>
    %cst_11 = arith.constant dense<0.000000e+00> : vector<10x96xf32>
    %26 = tpu.matmul %24, %25, %cst_11 {dimension_numbers = #tpu.dot_dimension_numbers<[1], [0], [0], [1], [0, 0, 1, 1], [], []>} : vector<10x32xf32>, vector<32x96xf32>, vector<10x96xf32> -> vector<10x96xf32>
    %c0_12 = arith.constant 0 : index
    %c0_13 = arith.constant 0 : index
    %27 = vector.load %arg6[%c0_12, %c0_13] : memref<1x96xf32, #tpu.memory_space<vmem>>, vector<1x96xf32>
    %28 = vector.broadcast %27 : vector<1x96xf32> to vector<10x96xf32>
    %29 = arith.addf %26, %28 : vector<10x96xf32>
    %c0_14 = arith.constant 0 : index
    %c0_15 = arith.constant 0 : index
    %30 = vector.load %arg7[%c0_14, %c0_15] : memref<10x96xf32, #tpu.memory_space<vmem>>, vector<10x96xf32>
    tpu.vector_store %arg7[%c0_14, %c0_15], %29 {strides = array<i32>} : memref<10x96xf32, #tpu.memory_space<vmem>>, vector<10x96xf32>,
    return
  }
  func.func @transform_0(%arg0: i32, %arg1: i32) -> (i32, i32) {
    %c0_i32 = arith.constant 0 : i32
    %c0_i32_0 = arith.constant 0 : i32
    return %arg0, %c0_i32 : i32, i32
  }
  func.func @transform_1(%arg0: i32, %arg1: i32) -> (i32, i32) {
    %c0_i32 = arith.constant 0 : i32
    %c0_i32_0 = arith.constant 0 : i32
    %c0_i32_1 = arith.constant 0 : i32
    return %c0_i32, %c0_i32_0 : i32, i32
  }
  func.func @transform_2(%arg0: i32, %arg1: i32) -> (i32, i32) {
    %c0_i32 = arith.constant 0 : i32
    %c0_i32_0 = arith.constant 0 : i32
    %c0_i32_1 = arith.constant 0 : i32
    return %c0_i32, %c0_i32_0 : i32, i32
  }
  func.func @transform_3(%arg0: i32, %arg1: i32) -> (i32, i32) {
    %c0_i32 = arith.constant 0 : i32
    %c0_i32_0 = arith.constant 0 : i32
    return %c0_i32, %arg1 : i32, i32
  }
  func.func @transform_4(%arg0: i32, %arg1: i32) -> (i32, i32) {
    %c0_i32 = arith.constant 0 : i32
    %c0_i32_0 = arith.constant 0 : i32
    return %c0_i32, %arg1 : i32, i32
  }
  func.func @transform_5(%arg0: i32, %arg1: i32) -> (i32, i32) {
    %c0_i32 = arith.constant 0 : i32
    return %arg0, %arg1 : i32, i32
  }
}

module attributes {stable_mosaic.version = 11 : i64} {
  func.func @_attn_kernel(%arg0: i32, %arg1: memref<1x5x8xf32, #tpu.memory_space<vmem>>, %arg2: memref<1x5x8xf32, #tpu.memory_space<vmem>>, %arg3: memref<1x5x8xf32, #tpu.memory_space<vmem>>, %arg4: memref<1x5x8xf32, #tpu.memory_space<vmem>>) attributes {dimension_semantics = [#tpu.dimension_semantics<parallel>], iteration_bounds = array<i64: 8>, scalar_prefetch = 0 : i64, scratch_operands = 0 : i64, tpu.core_type = #tpu.core_type<tc>, window_params = [{transform_indices = @transform_0, window_bounds = array<i64: 1, 5, 8>}, {transform_indices = @transform_1, window_bounds = array<i64: 1, 5, 8>}, {transform_indices = @transform_2, window_bounds = array<i64: 1, 5, 8>}, {transform_indices = @transform_3, window_bounds = array<i64: 1, 5, 8>}]} {
    %c0 = arith.constant 0 : index
    %c0_0 = arith.constant 0 : index
    %c0_1 = arith.constant 0 : index
    %0 = vector.load %arg1[%c0, %c0_0, %c0_1] : memref<1x5x8xf32, #tpu.memory_space<vmem>>, vector<1x5x8xf32>
    %1 = vector.shape_cast %0 : vector<1x5x8xf32> to vector<5x8xf32>
    %cst = arith.constant 0.353553385 : f32
    %2 = vector.broadcast %cst : f32 to vector<5x8xf32>
    %3 = arith.mulf %1, %2 : vector<5x8xf32>
    %c0_2 = arith.constant 0 : index
    %c0_3 = arith.constant 0 : index
    %c0_4 = arith.constant 0 : index
    %4 = vector.load %arg2[%c0_2, %c0_3, %c0_4] : memref<1x5x8xf32, #tpu.memory_space<vmem>>, vector<1x5x8xf32>
    %5 = vector.shape_cast %4 : vector<1x5x8xf32> to vector<5x8xf32>
    %c0_5 = arith.constant 0 : index
    %c0_6 = arith.constant 0 : index
    %c0_7 = arith.constant 0 : index
    %6 = vector.load %arg3[%c0_5, %c0_6, %c0_7] : memref<1x5x8xf32, #tpu.memory_space<vmem>>, vector<1x5x8xf32>
    %7 = vector.shape_cast %6 : vector<1x5x8xf32> to vector<5x8xf32>
    %cst_8 = arith.constant dense<0.000000e+00> : vector<5x5xf32>
    %8 = tpu.matmul %3, %5, %cst_8 {dimension_numbers = #tpu.dot_dimension_numbers<[1], [1], [0], [0], [0, 0, 1, 0], [], []>} : vector<5x8xf32>, vector<5x8xf32>, vector<5x5xf32> -> vector<5x5xf32>
    %cst_9 = arith.constant dense<0xFF800000> : vector<5xf32>
    %9 = vector.multi_reduction <maximumf>, %8, %cst_9 [1] : vector<5x5xf32> to vector<5xf32>
    %10 = vector.shape_cast %9 : vector<5xf32> to vector<5x1xf32>
    %11 = vector.broadcast %10 : vector<5x1xf32> to vector<5x5xf32>
    %12 = arith.subf %8, %11 : vector<5x5xf32>
    %13 = math.exp %12 : vector<5x5xf32>
    %cst_10 = arith.constant dense<0.000000e+00> : vector<5xf32>
    %14 = vector.multi_reduction <add>, %13, %cst_10 [1] : vector<5x5xf32> to vector<5xf32>
    %15 = vector.shape_cast %14 : vector<5xf32> to vector<5x1xf32>
    %16 = tpu.reciprocal %15 {approx = true} : vector<5x1xf32> -> vector<5x1xf32>
    %17 = vector.broadcast %16 : vector<5x1xf32> to vector<5x5xf32>
    %18 = arith.mulf %13, %17 : vector<5x5xf32>
    %cst_11 = arith.constant dense<0.000000e+00> : vector<5x8xf32>
    %19 = tpu.matmul %18, %7, %cst_11 {dimension_numbers = #tpu.dot_dimension_numbers<[1], [0], [0], [1], [0, 0, 1, 1], [], []>} : vector<5x5xf32>, vector<5x8xf32>, vector<5x8xf32> -> vector<5x8xf32>
    %c0_12 = arith.constant 0 : index
    %c0_13 = arith.constant 0 : index
    %c0_14 = arith.constant 0 : index
    %20 = vector.load %arg4[%c0_12, %c0_13, %c0_14] : memref<1x5x8xf32, #tpu.memory_space<vmem>>, vector<1x5x8xf32>
    %21 = vector.shape_cast %20 : vector<1x5x8xf32> to vector<5x8xf32>
    %22 = vector.shape_cast %19 : vector<5x8xf32> to vector<1x5x8xf32>
    tpu.vector_store %arg4[%c0_12, %c0_13, %c0_14], %22 {strides = array<i32>} : memref<1x5x8xf32, #tpu.memory_space<vmem>>, vector<1x5x8xf32>,
    return
  }
  func.func @transform_0(%arg0: i32) -> (i32, i32, i32) {
    %c0_i32 = arith.constant 0 : i32
    %c0_i32_0 = arith.constant 0 : i32
    %c0_i32_1 = arith.constant 0 : i32
    return %arg0, %c0_i32, %c0_i32_0 : i32, i32, i32
  }
  func.func @transform_1(%arg0: i32) -> (i32, i32, i32) {
    %c0_i32 = arith.constant 0 : i32
    %c0_i32_0 = arith.constant 0 : i32
    %c0_i32_1 = arith.constant 0 : i32
    return %arg0, %c0_i32, %c0_i32_0 : i32, i32, i32
  }
  func.func @transform_2(%arg0: i32) -> (i32, i32, i32) {
    %c0_i32 = arith.constant 0 : i32
    %c0_i32_0 = arith.constant 0 : i32
    %c0_i32_1 = arith.constant 0 : i32
    return %arg0, %c0_i32, %c0_i32_0 : i32, i32, i32
  }
  func.func @transform_3(%arg0: i32) -> (i32, i32, i32) {
    %c0_i32 = arith.constant 0 : i32
    %c0_i32_0 = arith.constant 0 : i32
    %c0_i32_1 = arith.constant 0 : i32
    return %arg0, %c0_i32, %c0_i32_0 : i32, i32, i32
  }
}

module attributes {stable_mosaic.version = 11 : i64} {
  func.func @_mm_kernel(%arg0: i32, %arg1: i32, %arg2: i32, %arg3: memref<10x32xf32, #tpu.memory_space<vmem>>, %arg4: memref<32x32xf32, #tpu.memory_space<vmem>>, %arg5: memref<1x32xf32, #tpu.memory_space<vmem>>, %arg6: memref<10x32xf32, #tpu.memory_space<vmem>>, %arg7: memref<10x32xf32, #tpu.memory_space<vmem>>, %arg8: memref<10x32xf32, #tpu.memory_space<vmem>>) attributes {dimension_semantics = [#tpu.dimension_semantics<parallel>, #tpu.dimension_semantics<parallel>, #tpu.dimension_semantics<arbitrary>], iteration_bounds = array<i64: 1, 1, 1>, scalar_prefetch = 0 : i64, scratch_operands = 1 : i64, tpu.core_type = #tpu.core_type<tc>, window_params = [{transform_indices = @transform_0, window_bounds = array<i64: 10, 32>}, {transform_indices = @transform_1, window_bounds = array<i64: 32, 32>}, {transform_indices = @transform_2, window_bounds = array<i64: 1, 32>}, {transform_indices = @transform_3, window_bounds = array<i64: 10, 32>}, {transform_indices = @transform_4, window_bounds = array<i64: 10, 32>}]} {
    %c0_i32 = arith.constant 0 : i32
    %0 = arith.cmpi eq, %arg2, %c0_i32 : i32
    %1 = arith.extui %0 : i1 to i32
    %c0_i32_0 = arith.constant 0 : i32
    %2 = arith.cmpi ne, %1, %c0_i32_0 : i32
    scf.if %2 {
      %cst_10 = arith.constant 0.000000e+00 : f32
      %12 = vector.broadcast %cst_10 : f32 to vector<10x32xf32>
      %c0_11 = arith.constant 0 : index
      %c0_12 = arith.constant 0 : index
      %13 = vector.load %arg8[%c0_11, %c0_12] : memref<10x32xf32, #tpu.memory_space<vmem>>, vector<10x32xf32>
      tpu.vector_store %arg8[%c0_11, %c0_12], %12 {strides = array<i32>} : memref<10x32xf32, #tpu.memory_space<vmem>>, vector<10x32xf32>,
    } else {
    }
    %c0 = arith.constant 0 : index
    %c0_1 = arith.constant 0 : index
    %3 = vector.load %arg8[%c0, %c0_1] : memref<10x32xf32, #tpu.memory_space<vmem>>, vector<10x32xf32>
    %c0_2 = arith.constant 0 : index
    %c0_3 = arith.constant 0 : index
    %4 = vector.load %arg3[%c0_2, %c0_3] : memref<10x32xf32, #tpu.memory_space<vmem>>, vector<10x32xf32>
    %c0_4 = arith.constant 0 : index
    %c0_5 = arith.constant 0 : index
    %5 = vector.load %arg4[%c0_4, %c0_5] : memref<32x32xf32, #tpu.memory_space<vmem>>, vector<32x32xf32>
    %cst = arith.constant dense<0.000000e+00> : vector<10x32xf32>
    %6 = tpu.matmul %4, %5, %cst {dimension_numbers = #tpu.dot_dimension_numbers<[1], [0], [0], [1], [0, 0, 1, 1], [], []>} : vector<10x32xf32>, vector<32x32xf32>, vector<10x32xf32> -> vector<10x32xf32>
    %7 = arith.addf %3, %6 : vector<10x32xf32>
    %c0_6 = arith.constant 0 : index
    %c0_7 = arith.constant 0 : index
    %8 = vector.load %arg8[%c0_6, %c0_7] : memref<10x32xf32, #tpu.memory_space<vmem>>, vector<10x32xf32>
    tpu.vector_store %arg8[%c0_6, %c0_7], %7 {strides = array<i32>} : memref<10x32xf32, #tpu.memory_space<vmem>>, vector<10x32xf32>,
    %c0_i32_8 = arith.constant 0 : i32
    %9 = arith.cmpi eq, %arg2, %c0_i32_8 : i32
    %10 = arith.extui %9 : i1 to i32
    %c0_i32_9 = arith.constant 0 : i32
    %11 = arith.cmpi ne, %10, %c0_i32_9 : i32
    scf.if %11 {
      %c0_10 = arith.constant 0 : index
      %c0_11 = arith.constant 0 : index
      %12 = vector.load %arg8[%c0_10, %c0_11] : memref<10x32xf32, #tpu.memory_space<vmem>>, vector<10x32xf32>
      %c0_12 = arith.constant 0 : index
      %c0_13 = arith.constant 0 : index
      %13 = vector.load %arg5[%c0_12, %c0_13] : memref<1x32xf32, #tpu.memory_space<vmem>>, vector<1x32xf32>
      %14 = vector.broadcast %13 : vector<1x32xf32> to vector<10x32xf32>
      %15 = arith.addf %12, %14 : vector<10x32xf32>
      %c0_14 = arith.constant 0 : index
      %c0_15 = arith.constant 0 : index
      %16 = vector.load %arg6[%c0_14, %c0_15] : memref<10x32xf32, #tpu.memory_space<vmem>>, vector<10x32xf32>
      %17 = arith.addf %15, %16 : vector<10x32xf32>
      %c0_16 = arith.constant 0 : index
      %c0_17 = arith.constant 0 : index
      %18 = vector.load %arg7[%c0_16, %c0_17] : memref<10x32xf32, #tpu.memory_space<vmem>>, vector<10x32xf32>
      tpu.vector_store %arg7[%c0_16, %c0_17], %17 {strides = array<i32>} : memref<10x32xf32, #tpu.memory_space<vmem>>, vector<10x32xf32>,
    } else {
    }
    return
  }
  func.func @transform_0(%arg0: i32, %arg1: i32, %arg2: i32) -> (i32, i32) {
    %c0_i32 = arith.constant 0 : i32
    return %arg0, %arg2 : i32, i32
  }
  func.func @transform_1(%arg0: i32, %arg1: i32, %arg2: i32) -> (i32, i32) {
    %c0_i32 = arith.constant 0 : i32
    return %arg2, %arg1 : i32, i32
  }
  func.func @transform_2(%arg0: i32, %arg1: i32, %arg2: i32) -> (i32, i32) {
    %c0_i32 = arith.constant 0 : i32
    %c0_i32_0 = arith.constant 0 : i32
    return %c0_i32, %arg1 : i32, i32
  }
  func.func @transform_3(%arg0: i32, %arg1: i32, %arg2: i32) -> (i32, i32) {
    %c0_i32 = arith.constant 0 : i32
    return %arg0, %arg1 : i32, i32
  }
  func.func @transform_4(%arg0: i32, %arg1: i32, %arg2: i32) -> (i32, i32) {
    %c0_i32 = arith.constant 0 : i32
    return %arg0, %arg1 : i32, i32
  }
}

module attributes {stable_mosaic.version = 11 : i64} {
  func.func @_ln_mm_kernel(%arg0: i32, %arg1: i32, %arg2: memref<10x32xf32, #tpu.memory_space<vmem>>, %arg3: memref<1x32xf32, #tpu.memory_space<vmem>>, %arg4: memref<1x32xf32, #tpu.memory_space<vmem>>, %arg5: memref<32x128xf32, #tpu.memory_space<vmem>>, %arg6: memref<1x128xf32, #tpu.memory_space<vmem>>, %arg7: memref<10x128xf32, #tpu.memory_space<vmem>>) attributes {dimension_semantics = [#tpu.dimension_semantics<parallel>, #tpu.dimension_semantics<parallel>], iteration_bounds = array<i64: 1, 1>, scalar_prefetch = 0 : i64, scratch_operands = 0 : i64, tpu.core_type = #tpu.core_type<tc>, window_params = [{transform_indices = @transform_0, window_bounds = array<i64: 10, 32>}, {pipeline_mode = #tpu.pipeline_mode<synchronous>, transform_indices = @transform_1, window_bounds = array<i64: 1, 32>}, {pipeline_mode = #tpu.pipeline_mode<synchronous>, transform_indices = @transform_2, window_bounds = array<i64: 1, 32>}, {transform_indices = @transform_3, window_bounds = array<i64: 32, 128>}, {transform_indices = @transform_4, window_bounds = array<i64: 1, 128>}, {transform_indices = @transform_5, window_bounds = array<i64: 10, 128>}]} {
    %c0 = arith.constant 0 : index
    %c0_0 = arith.constant 0 : index
    %0 = vector.load %arg2[%c0, %c0_0] : memref<10x32xf32, #tpu.memory_space<vmem>>, vector<10x32xf32>
    %cst = arith.constant dense<0.000000e+00> : vector<10xf32>
    %1 = vector.multi_reduction <add>, %0, %cst [1] : vector<10x32xf32> to vector<10xf32>
    %2 = vector.shape_cast %1 : vector<10xf32> to vector<10x1xf32>
    %cst_1 = arith.constant 3.200000e+01 : f32
    %3 = vector.broadcast %cst_1 : f32 to vector<10x1xf32>
    %4 = arith.divf %2, %3 : vector<10x1xf32>
    %5 = vector.broadcast %4 : vector<10x1xf32> to vector<10x32xf32>
    %6 = arith.subf %0, %5 : vector<10x32xf32>
    %7 = arith.mulf %6, %6 : vector<10x32xf32>
    %cst_2 = arith.constant dense<0.000000e+00> : vector<10xf32>
    %8 = vector.multi_reduction <add>, %7, %cst_2 [1] : vector<10x32xf32> to vector<10xf32>
    %9 = vector.shape_cast %8 : vector<10xf32> to vector<10x1xf32>
    %cst_3 = arith.constant 3.200000e+01 : f32
    %10 = vector.broadcast %cst_3 : f32 to vector<10x1xf32>
    %11 = arith.divf %9, %10 : vector<10x1xf32>
    %12 = vector.broadcast %4 : vector<10x1xf32> to vector<10x32xf32>
    %13 = arith.subf %0, %12 : vector<10x32xf32>
    %cst_4 = arith.constant 9.99999974E-6 : f32
    %14 = vector.broadcast %cst_4 : f32 to vector<10x1xf32>
    %15 = arith.addf %11, %14 : vector<10x1xf32>
    %16 = math.rsqrt %15 : vector<10x1xf32>
    %17 = vector.broadcast %16 : vector<10x1xf32> to vector<10x32xf32>
    %18 = arith.mulf %13, %17 : vector<10x32xf32>
    %c0_5 = arith.constant 0 : index
    %c0_6 = arith.constant 0 : index
    %19 = vector.load %arg3[%c0_5, %c0_6] : memref<1x32xf32, #tpu.memory_space<vmem>>, vector<1x32xf32>
    %20 = vector.broadcast %19 : vector<1x32xf32> to vector<10x32xf32>
    %21 = arith.mulf %18, %20 : vector<10x32xf32>
    %c0_7 = arith.constant 0 : index
    %c0_8 = arith.constant 0 : index
    %22 = vector.load %arg4[%c0_7, %c0_8] : memref<1x32xf32, #tpu.memory_space<vmem>>, vector<1x32xf32>
    %23 = vector.broadcast %22 : vector<1x32xf32> to vector<10x32xf32>
    %24 = arith.addf %21, %23 : vector<10x32xf32>
    %c0_9 = arith.constant 0 : index
    %c0_10 = arith.constant 0 : index
    %25 = vector.load %arg5[%c0_9, %c0_10] : memref<32x128xf32, #tpu.memory_space<vmem>>, vector<32x128xf32>
    %cst_11 = arith.constant dense<0.000000e+00> : vector<10x128xf32>
    %26 = tpu.matmul %24, %25, %cst_11 {dimension_numbers = #tpu.dot_dimension_numbers<[1], [0], [0], [1], [0, 0, 1, 1], [], []>} : vector<10x32xf32>, vector<32x128xf32>, vector<10x128xf32> -> vector<10x128xf32>
    %c0_12 = arith.constant 0 : index
    %c0_13 = arith.constant 0 : index
    %27 = vector.load %arg6[%c0_12, %c0_13] : memref<1x128xf32, #tpu.memory_space<vmem>>, vector<1x128xf32>
    %28 = vector.broadcast %27 : vector<1x128xf32> to vector<10x128xf32>
    %29 = arith.addf %26, %28 : vector<10x128xf32>
    %cst_14 = arith.constant 1.702000e+00 : f32
    %30 = vector.broadcast %cst_14 : f32 to vector<10x128xf32>
    %31 = arith.mulf %30, %29 : vector<10x128xf32>
    %32 = arith.negf %31 : vector<10x128xf32>
    %33 = math.exp %32 : vector<10x128xf32>
    %cst_15 = arith.constant 1.000000e+00 : f32
    %34 = vector.broadcast %cst_15 : f32 to vector<10x128xf32>
    %35 = arith.addf %34, %33 : vector<10x128xf32>
    %36 = arith.divf %34, %35 : vector<10x128xf32>
    %37 = arith.mulf %29, %36 : vector<10x128xf32>
    %c0_16 = arith.constant 0 : index
    %c0_17 = arith.constant 0 : index
    %38 = vector.load %arg7[%c0_16, %c0_17] : memref<10x128xf32, #tpu.memory_space<vmem>>, vector<10x128xf32>
    tpu.vector_store %arg7[%c0_16, %c0_17], %37 {strides = array<i32>} : memref<10x128xf32, #tpu.memory_space<vmem>>, vector<10x128xf32>,
    return
  }
  func.func @transform_0(%arg0: i32, %arg1: i32) -> (i32, i32) {
    %c0_i32 = arith.constant 0 : i32
    %c0_i32_0 = arith.constant 0 : i32
    return %arg0, %c0_i32 : i32, i32
  }
  func.func @transform_1(%arg0: i32, %arg1: i32) -> (i32, i32) {
    %c0_i32 = arith.constant 0 : i32
    %c0_i32_0 = arith.constant 0 : i32
    %c0_i32_1 = arith.constant 0 : i32
    return %c0_i32, %c0_i32_0 : i32, i32
  }
  func.func @transform_2(%arg0: i32, %arg1: i32) -> (i32, i32) {
    %c0_i32 = arith.constant 0 : i32
    %c0_i32_0 = arith.constant 0 : i32
    %c0_i32_1 = arith.constant 0 : i32
    return %c0_i32, %c0_i32_0 : i32, i32
  }
  func.func @transform_3(%arg0: i32, %arg1: i32) -> (i32, i32) {
    %c0_i32 = arith.constant 0 : i32
    %c0_i32_0 = arith.constant 0 : i32
    return %c0_i32, %arg1 : i32, i32
  }
  func.func @transform_4(%arg0: i32, %arg1: i32) -> (i32, i32) {
    %c0_i32 = arith.constant 0 : i32
    %c0_i32_0 = arith.constant 0 : i32
    return %c0_i32, %arg1 : i32, i32
  }
  func.func @transform_5(%arg0: i32, %arg1: i32) -> (i32, i32) {
    %c0_i32 = arith.constant 0 : i32
    return %arg0, %arg1 : i32, i32
  }
}

module attributes {stable_mosaic.version = 11 : i64} {
  func.func @_mm_kernel(%arg0: i32, %arg1: i32, %arg2: i32, %arg3: memref<10x128xf32, #tpu.memory_space<vmem>>, %arg4: memref<128x32xf32, #tpu.memory_space<vmem>>, %arg5: memref<1x32xf32, #tpu.memory_space<vmem>>, %arg6: memref<10x32xf32, #tpu.memory_space<vmem>>, %arg7: memref<10x32xf32, #tpu.memory_space<vmem>>, %arg8: memref<10x32xf32, #tpu.memory_space<vmem>>) attributes {dimension_semantics = [#tpu.dimension_semantics<parallel>, #tpu.dimension_semantics<parallel>, #tpu.dimension_semantics<arbitrary>], iteration_bounds = array<i64: 1, 1, 1>, scalar_prefetch = 0 : i64, scratch_operands = 1 : i64, tpu.core_type = #tpu.core_type<tc>, window_params = [{transform_indices = @transform_0, window_bounds = array<i64: 10, 128>}, {transform_indices = @transform_1, window_bounds = array<i64: 128, 32>}, {transform_indices = @transform_2, window_bounds = array<i64: 1, 32>}, {transform_indices = @transform_3, window_bounds = array<i64: 10, 32>}, {transform_indices = @transform_4, window_bounds = array<i64: 10, 32>}]} {
    %c0_i32 = arith.constant 0 : i32
    %0 = arith.cmpi eq, %arg2, %c0_i32 : i32
    %1 = arith.extui %0 : i1 to i32
    %c0_i32_0 = arith.constant 0 : i32
    %2 = arith.cmpi ne, %1, %c0_i32_0 : i32
    scf.if %2 {
      %cst_10 = arith.constant 0.000000e+00 : f32
      %12 = vector.broadcast %cst_10 : f32 to vector<10x32xf32>
      %c0_11 = arith.constant 0 : index
      %c0_12 = arith.constant 0 : index
      %13 = vector.load %arg8[%c0_11, %c0_12] : memref<10x32xf32, #tpu.memory_space<vmem>>, vector<10x32xf32>
      tpu.vector_store %arg8[%c0_11, %c0_12], %12 {strides = array<i32>} : memref<10x32xf32, #tpu.memory_space<vmem>>, vector<10x32xf32>,
    } else {
    }
    %c0 = arith.constant 0 : index
    %c0_1 = arith.constant 0 : index
    %3 = vector.load %arg8[%c0, %c0_1] : memref<10x32xf32, #tpu.memory_space<vmem>>, vector<10x32xf32>
    %c0_2 = arith.constant 0 : index
    %c0_3 = arith.constant 0 : index
    %4 = vector.load %arg3[%c0_2, %c0_3] : memref<10x128xf32, #tpu.memory_space<vmem>>, vector<10x128xf32>
    %c0_4 = arith.constant 0 : index
    %c0_5 = arith.constant 0 : index
    %5 = vector.load %arg4[%c0_4, %c0_5] : memref<128x32xf32, #tpu.memory_space<vmem>>, vector<128x32xf32>
    %cst = arith.constant dense<0.000000e+00> : vector<10x32xf32>
    %6 = tpu.matmul %4, %5, %cst {dimension_numbers = #tpu.dot_dimension_numbers<[1], [0], [0], [1], [0, 0, 1, 1], [], []>} : vector<10x128xf32>, vector<128x32xf32>, vector<10x32xf32> -> vector<10x32xf32>
    %7 = arith.addf %3, %6 : vector<10x32xf32>
    %c0_6 = arith.constant 0 : index
    %c0_7 = arith.constant 0 : index
    %8 = vector.load %arg8[%c0_6, %c0_7] : memref<10x32xf32, #tpu.memory_space<vmem>>, vector<10x32xf32>
    tpu.vector_store %arg8[%c0_6, %c0_7], %7 {strides = array<i32>} : memref<10x32xf32, #tpu.memory_space<vmem>>, vector<10x32xf32>,
    %c0_i32_8 = arith.constant 0 : i32
    %9 = arith.cmpi eq, %arg2, %c0_i32_8 : i32
    %10 = arith.extui %9 : i1 to i32
    %c0_i32_9 = arith.constant 0 : i32
    %11 = arith.cmpi ne, %10, %c0_i32_9 : i32
    scf.if %11 {
      %c0_10 = arith.constant 0 : index
      %c0_11 = arith.constant 0 : index
      %12 = vector.load %arg8[%c0_10, %c0_11] : memref<10x32xf32, #tpu.memory_space<vmem>>, vector<10x32xf32>
      %c0_12 = arith.constant 0 : index
      %c0_13 = arith.constant 0 : index
      %13 = vector.load %arg5[%c0_12, %c0_13] : memref<1x32xf32, #tpu.memory_space<vmem>>, vector<1x32xf32>
      %14 = vector.broadcast %13 : vector<1x32xf32> to vector<10x32xf32>
      %15 = arith.addf %12, %14 : vector<10x32xf32>
      %c0_14 = arith.constant 0 : index
      %c0_15 = arith.constant 0 : index
      %16 = vector.load %arg6[%c0_14, %c0_15] : memref<10x32xf32, #tpu.memory_space<vmem>>, vector<10x32xf32>
      %17 = arith.addf %15, %16 : vector<10x32xf32>
      %c0_16 = arith.constant 0 : index
      %c0_17 = arith.constant 0 : index
      %18 = vector.load %arg7[%c0_16, %c0_17] : memref<10x32xf32, #tpu.memory_space<vmem>>, vector<10x32xf32>
      tpu.vector_store %arg7[%c0_16, %c0_17], %17 {strides = array<i32>} : memref<10x32xf32, #tpu.memory_space<vmem>>, vector<10x32xf32>,
    } else {
    }
    return
  }
  func.func @transform_0(%arg0: i32, %arg1: i32, %arg2: i32) -> (i32, i32) {
    %c0_i32 = arith.constant 0 : i32
    return %arg0, %arg2 : i32, i32
  }
  func.func @transform_1(%arg0: i32, %arg1: i32, %arg2: i32) -> (i32, i32) {
    %c0_i32 = arith.constant 0 : i32
    return %arg2, %arg1 : i32, i32
  }
  func.func @transform_2(%arg0: i32, %arg1: i32, %arg2: i32) -> (i32, i32) {
    %c0_i32 = arith.constant 0 : i32
    %c0_i32_0 = arith.constant 0 : i32
    return %c0_i32, %arg1 : i32, i32
  }
  func.func @transform_3(%arg0: i32, %arg1: i32, %arg2: i32) -> (i32, i32) {
    %c0_i32 = arith.constant 0 : i32
    return %arg0, %arg1 : i32, i32
  }
  func.func @transform_4(%arg0: i32, %arg1: i32, %arg2: i32) -> (i32, i32) {
    %c0_i32 = arith.constant 0 : i32
    return %arg0, %arg1 : i32, i32
  }
}

module attributes {stable_mosaic.version = 11 : i64} {
  func.func @_ln_kernel(%arg0: i32, %arg1: memref<8x32xf32, #tpu.memory_space<vmem>>, %arg2: memref<1x32xf32, #tpu.memory_space<vmem>>, %arg3: memref<1x32xf32, #tpu.memory_space<vmem>>, %arg4: memref<8x32xf32, #tpu.memory_space<vmem>>) attributes {dimension_semantics = [#tpu.dimension_semantics<parallel>], iteration_bounds = array<i64: 1>, scalar_prefetch = 0 : i64, scratch_operands = 0 : i64, tpu.core_type = #tpu.core_type<tc>, window_params = [{transform_indices = @transform_0, window_bounds = array<i64: 8, 32>}, {pipeline_mode = #tpu.pipeline_mode<synchronous>, transform_indices = @transform_1, window_bounds = array<i64: 1, 32>}, {pipeline_mode = #tpu.pipeline_mode<synchronous>, transform_indices = @transform_2, window_bounds = array<i64: 1, 32>}, {transform_indices = @transform_3, window_bounds = array<i64: 8, 32>}]} {
    %c0 = arith.constant 0 : index
    %c0_0 = arith.constant 0 : index
    %0 = vector.load %arg1[%c0, %c0_0] : memref<8x32xf32, #tpu.memory_space<vmem>>, vector<8x32xf32>
    %cst = arith.constant dense<0.000000e+00> : vector<8xf32>
    %1 = vector.multi_reduction <add>, %0, %cst [1] : vector<8x32xf32> to vector<8xf32>
    %2 = vector.shape_cast %1 : vector<8xf32> to vector<8x1xf32>
    %cst_1 = arith.constant 3.200000e+01 : f32
    %3 = vector.broadcast %cst_1 : f32 to vector<8x1xf32>
    %4 = arith.divf %2, %3 : vector<8x1xf32>
    %5 = vector.broadcast %4 : vector<8x1xf32> to vector<8x32xf32>
    %6 = arith.subf %0, %5 : vector<8x32xf32>
    %7 = arith.mulf %6, %6 : vector<8x32xf32>
    %cst_2 = arith.constant dense<0.000000e+00> : vector<8xf32>
    %8 = vector.multi_reduction <add>, %7, %cst_2 [1] : vector<8x32xf32> to vector<8xf32>
    %9 = vector.shape_cast %8 : vector<8xf32> to vector<8x1xf32>
    %cst_3 = arith.constant 3.200000e+01 : f32
    %10 = vector.broadcast %cst_3 : f32 to vector<8x1xf32>
    %11 = arith.divf %9, %10 : vector<8x1xf32>
    %12 = vector.broadcast %4 : vector<8x1xf32> to vector<8x32xf32>
    %13 = arith.subf %0, %12 : vector<8x32xf32>
    %cst_4 = arith.constant 9.99999974E-6 : f32
    %14 = vector.broadcast %cst_4 : f32 to vector<8x1xf32>
    %15 = arith.addf %11, %14 : vector<8x1xf32>
    %16 = math.rsqrt %15 : vector<8x1xf32>
    %17 = vector.broadcast %16 : vector<8x1xf32> to vector<8x32xf32>
    %18 = arith.mulf %13, %17 : vector<8x32xf32>
    %c0_5 = arith.constant 0 : index
    %c0_6 = arith.constant 0 : index
    %19 = vector.load %arg2[%c0_5, %c0_6] : memref<1x32xf32, #tpu.memory_space<vmem>>, vector<1x32xf32>
    %20 = vector.broadcast %19 : vector<1x32xf32> to vector<8x32xf32>
    %21 = arith.mulf %18, %20 : vector<8x32xf32>
    %c0_7 = arith.constant 0 : index
    %c0_8 = arith.constant 0 : index
    %22 = vector.load %arg3[%c0_7, %c0_8] : memref<1x32xf32, #tpu.memory_space<vmem>>, vector<1x32xf32>
    %23 = vector.broadcast %22 : vector<1x32xf32> to vector<8x32xf32>
    %24 = arith.addf %21, %23 : vector<8x32xf32>
    %c0_9 = arith.constant 0 : index
    %c0_10 = arith.constant 0 : index
    %25 = vector.load %arg4[%c0_9, %c0_10] : memref<8x32xf32, #tpu.memory_space<vmem>>, vector<8x32xf32>
    tpu.vector_store %arg4[%c0_9, %c0_10], %24 {strides = array<i32>} : memref<8x32xf32, #tpu.memory_space<vmem>>, vector<8x32xf32>,
    return
  }
  func.func @transform_0(%arg0: i32) -> (i32, i32) {
    %c0_i32 = arith.constant 0 : i32
    %c0_i32_0 = arith.constant 0 : i32
    return %arg0, %c0_i32 : i32, i32
  }
  func.func @transform_1(%arg0: i32) -> (i32, i32) {
    %c0_i32 = arith.constant 0 : i32
    %c0_i32_0 = arith.constant 0 : i32
    %c0_i32_1 = arith.constant 0 : i32
    return %c0_i32, %c0_i32_0 : i32, i32
  }
  func.func @transform_2(%arg0: i32) -> (i32, i32) {
    %c0_i32 = arith.constant 0 : i32
    %c0_i32_0 = arith.constant 0 : i32
    %c0_i32_1 = arith.constant 0 : i32
    return %c0_i32, %c0_i32_0 : i32, i32
  }
  func.func @transform_3(%arg0: i32) -> (i32, i32) {
    %c0_i32 = arith.constant 0 : i32
    %c0_i32_0 = arith.constant 0 : i32
    return %arg0, %c0_i32 : i32, i32
  }
}

</mosaic_0001>

<llo_original>
// kernel: _lambda_.14
$region0: #{_lambda_.14}
  #allocation0 [shape = 'u32[]', space=smem, size = 0x4, offset = 0x4, fixed_abs, tag = 'smem constant byte address 0x4 - core index']
  #allocation1 [shape = 'u32[144,128]{1,0:T(1,128)}', space=vmem, size = 0x12000, scoped, tag = 'internal scratch']
  %s0 = inlined_call_operand.vmem [shape: f32[10,32], index: 0, kind: input, shape index: {}]
  %s1 = inlined_call_operand.vmem [shape: f32[1,32], index: 1, kind: input, shape index: {}]
  %s2 = inlined_call_operand.vmem [shape: f32[1,32], index: 2, kind: input, shape index: {}]
  %s3 = inlined_call_operand.vmem [shape: f32[10,32], index: 3, kind: output, shape index: {}]
  %s4 = sld [smem:[#allocation0]]
  $region22: #{_lambda_.14} parent=0
    _
  %s6 = ssub.s32 1, %s4
  %s7 = scalar_select 0, %s6, %s4
  // Predicated region
  $region2: #{_lambda_.14} parent=0 // pred_check
    _
  $region3: #{_lambda_.14} parent=0 // pred_check_branch
    %9 = sbr.rel (0) target = $region5
  $region4: #{_lambda_.14} parent=0 // pred_region
    _
  $region5: #{_lambda_.14} parent=0 // pred_fallthru
    _
  // Predicated region
  $region6: #{_lambda_.14} parent=0 // pred_check
    _
  $region7: #{_lambda_.14} parent=0 // pred_check_branch
    %11 = sbr.rel (0) target = $region9
  $region8: #{_lambda_.14} parent=0 // pred_region
    _
  $region9: #{_lambda_.14} parent=0 // pred_fallthru
    _
  // Predicated region
  $region10: #{_lambda_.14} parent=0 // pred_check
    _
  $region11: #{_lambda_.14} parent=0 // pred_check_branch
    %13 = sbr.rel (0) target = $region13
  $region12: #{_lambda_.14} parent=0 // pred_region
    _
  $region13: #{_lambda_.14} parent=0 // pred_fallthru
    _
  %v14 = vld [vmem:[%s0] sm:$0xff]
  %v15 = vld [vmem:[%s0 + $0x8] sm:$0x3]
  %vm16 = vcmask 261120
  %v17 = vsel %vm16, %v14, 0.0
  %18 = vadd.xlane.f32.xlu0 %v17
  %v19 = vpop.xlane.xlu0 %18
  %vm20 = vcmask 254976
  %v21 = vsel %vm20, %v15, 0.0
  %22 = vadd.xlane.f32.xlu0 %v21
  %v23 = vpop.xlane.xlu0 %22
  %v24 = vrcp.pop 32.0
  %v25 = vmul.f32 %v19, %v24
  %v26 = vmul.f32 %v23, %v24
  %v27 = vsub.f32 %v14, %v25
  %v28 = vsub.f32 %v15, %v26
  %v29 = vmul.f32 %v27, %v27
  %v30 = vmul.f32 %v28, %v28
  %v31 = vsel %vm16, %v29, 0.0
  %32 = vadd.xlane.f32.xlu0 %v31
  %v33 = vpop.xlane.xlu0 %32
  %v34 = vsel %vm20, %v30, 0.0
  %35 = vadd.xlane.f32.xlu0 %v34
  %v36 = vpop.xlane.xlu0 %35
  %v37 = vmul.f32 %v33, %v24
  %v38 = vmul.f32 %v36, %v24
  %v39 = vadd.f32 %v37, 1e-05
  %v40 = vadd.f32 %v38, 1e-05
  %v41 = vrsqrt.pop %v39
  %v42 = vrsqrt.pop %v40
  %v43 = vmul.f32 %v27, %v41
  %v44 = vmul.f32 %v28, %v42
  %v45 = vld [vmem:[%s1] sm:$0x1]
  %v47 = vlaneseq
  %v48 = vshrl.u32 %v47, 7
  %v49 = vsub.s32 0, %v48
  %v50 = vrot.slane %v45, %v49
  %v52 = vmul.f32 %v43, %v50
  %v53 = vmul.f32 %v44, %v50
  %v54 = vld [vmem:[%s2] sm:$0x1]
  %v56 = vlaneseq
  %v57 = vshrl.u32 %v56, 7
  %v58 = vsub.s32 0, %v57
  %v59 = vrot.slane %v54, %v58
  %v61 = vadd.f32 %v52, %v59
  %v62 = vadd.f32 %v53, %v59
  %63 = vst.msk [vmem:[%s3] sm:$0xff] %vm16, %v61
  %64 = vst.msk [vmem:[%s3 + $0x8] sm:$0x3] %vm20, %v62
  // Predicated region
  $region14: #{_lambda_.14} parent=0 // pred_check
    _
  $region15: #{_lambda_.14} parent=0 // pred_check_branch
    %66 = sbr.rel (0) target = $region17
  $region16: #{_lambda_.14} parent=0 // pred_region
    _
  $region17: #{_lambda_.14} parent=0 // pred_fallthru
    _
  // Predicated region
  $region18: #{_lambda_.14} parent=0 // pred_check
    _
  $region19: #{_lambda_.14} parent=0 // pred_check_branch
    %68 = sbr.rel (0) target = $region21
  $region20: #{_lambda_.14} parent=0 // pred_region
    _
  $region21: #{_lambda_.14} parent=0 // pred_fallthru
    _

// kernel: _lambda_.16
$region0: #{_lambda_.16}
  #allocation0 [shape = 'u32[]', space=smem, size = 0x4, offset = 0x4, fixed_abs, tag = 'smem constant byte address 0x4 - core index']
  #allocation1 [shape = 'u32[144,128]{1,0:T(1,128)}', space=vmem, size = 0x12000, scoped, tag = 'internal scratch']
  %s0 = inlined_call_operand.vmem [shape: f32[8,5,8], index: 0, kind: input, shape index: {}]
  %s1 = inlined_call_operand.vmem [shape: f32[8,5,8], index: 1, kind: input, shape index: {}]
  %s2 = inlined_call_operand.vmem [shape: f32[8,5,8], index: 2, kind: input, shape index: {}]
  %s3 = inlined_call_operand.vmem [shape: f32[8,5,8], index: 3, kind: output, shape index: {}]
  %s4 = sld [smem:[#allocation0]]
  $region45: #{_lambda_.16} parent=0
    _
  %s6 = ssub.s32 1, %s4
  %s7 = scalar_select 0, %s6, %s4
  loop: start=0, step=1, limit=10
  $region2: #{_lambda_.16} parent=0 // loop_pre_header
    _
  $region3: #{_lambda_.16} parent=0 // loop_header
    %s9 = sphi 0, %s13
    %p10 = scmp.ge.s32.totalorder %s9, 10
    %s19 = sphi 0, %s21
    %s22 = sphi 0, %s19
    %s23 = sphi 0, %s22
    %s39 = sphi 0, %s23
    %s45 = sphi 0, %s47
    %s48 = sphi 0, %s45
    %s49 = sphi 0, %s48
    %s65 = sphi 0, %s49
    %s71 = sphi 0, %s73
    %s74 = sphi 0, %s71
    %s75 = sphi 0, %s74
    %s91 = sphi 0, %s75
    %s97 = sphi 0, %s99
    %s100 = sphi 0, %s97
    %s101 = sphi 0, %s100
    %s117 = sphi 0, %s101
  $region4: #{_lambda_.16} parent=0 // loop_header_branch
    %12 = sbr.rel (%p10) target = $region8
  $region5: #{_lambda_.16} parent=0 // loop_body
    %s14 = ssub.s32 %s9, 1
    %s15 = ssub.s32 %s9, 2
    %s16 = sadd.s32 %s9, 1
    %s17 = ssub.s32 %s9, %s16
    %p18 = scmp.eq.s32.totalorder %s17, 0
    %s20 = sadd.s32 %s19, 1
    %s21 = scalar_select %p18, %s19, %s20
    %p24 = pneg %p18
    %p25 = scmp.eq.s32.totalorder %s9, 7
    %p26 = por %p24, %p25
    %p27 = scmp.ne.s32.totalorder %s19, %s22
    %p28 = scmp.eq.s32.totalorder %s9, 0
    %p29 = por %p27, %p28
    %p30 = scmp.ne.s32.totalorder %s19, %s22
    %p31 = scmp.eq.s32.totalorder %s14, 7
    %p32 = por %p30, %p31
    %p33 = scmp.ne.s32.totalorder %s22, %s23
    %p34 = scmp.eq.s32.totalorder %s14, 0
    %p35 = por %p33, %p34
    %p36 = scmp.ne.s32.totalorder %s22, %s23
    %p37 = scmp.eq.s32.totalorder %s15, 7
    %p38 = por %p36, %p37
    %p40 = scmp.ne.s32.totalorder %s23, %s39
    %p41 = scmp.eq.s32.totalorder %s15, 0
    %p42 = por %p40, %p41
    %s43 = ssub.s32 %s9, %s16
    %p44 = scmp.eq.s32.totalorder %s43, 0
    %s46 = sadd.s32 %s45, 1
    %s47 = scalar_select %p44, %s45, %s46
    %p50 = pneg %p44
    %p51 = scmp.eq.s32.totalorder %s9, 7
    %p52 = por %p50, %p51
    %p53 = scmp.ne.s32.totalorder %s45, %s48
    %p54 = scmp.eq.s32.totalorder %s9, 0
    %p55 = por %p53, %p54
    %p56 = scmp.ne.s32.totalorder %s45, %s48
    %p57 = scmp.eq.s32.totalorder %s14, 7
    %p58 = por %p56, %p57
    %p59 = scmp.ne.s32.totalorder %s48, %s49
    %p60 = scmp.eq.s32.totalorder %s14, 0
    %p61 = por %p59, %p60
    %p62 = scmp.ne.s32.totalorder %s48, %s49
    %p63 = scmp.eq.s32.totalorder %s15, 7
    %p64 = por %p62, %p63
    %p66 = scmp.ne.s32.totalorder %s49, %s65
    %p67 = scmp.eq.s32.totalorder %s15, 0
    %p68 = por %p66, %p67
    %s69 = ssub.s32 %s9, %s16
    %p70 = scmp.eq.s32.totalorder %s69, 0
    %s72 = sadd.s32 %s71, 1
    %s73 = scalar_select %p70, %s71, %s72
    %p76 = pneg %p70
    %p77 = scmp.eq.s32.totalorder %s9, 7
    %p78 = por %p76, %p77
    %p79 = scmp.ne.s32.totalorder %s71, %s74
    %p80 = scmp.eq.s32.totalorder %s9, 0
    %p81 = por %p79, %p80
    %p82 = scmp.ne.s32.totalorder %s71, %s74
    %p83 = scmp.eq.s32.totalorder %s14, 7
    %p84 = por %p82, %p83
    %p85 = scmp.ne.s32.totalorder %s74, %s75
    %p86 = scmp.eq.s32.totalorder %s14, 0
    %p87 = por %p85, %p86
    %p88 = scmp.ne.s32.totalorder %s74, %s75
    %p89 = scmp.eq.s32.totalorder %s15, 7
    %p90 = por %p88, %p89
    %p92 = scmp.ne.s32.totalorder %s75, %s91
    %p93 = scmp.eq.s32.totalorder %s15, 0
    %p94 = por %p92, %p93
    %s95 = ssub.s32 %s9, %s16
    %p96 = scmp.eq.s32.totalorder %s95, 0
    %s98 = sadd.s32 %s97, 1
    %s99 = scalar_select %p96, %s97, %s98
    %p102 = pneg %p96
    %p103 = scmp.eq.s32.totalorder %s9, 7
    %p104 = por %p102, %p103
    %p105 = scmp.ne.s32.totalorder %s97, %s100
    %p106 = scmp.eq.s32.totalorder %s9, 0
    %p107 = por %p105, %p106
    %p108 = scmp.ne.s32.totalorder %s97, %s100
    %p109 = scmp.eq.s32.totalorder %s14, 7
    %p110 = por %p108, %p109
    %p111 = scmp.ne.s32.totalorder %s100, %s101
    %p112 = scmp.eq.s32.totalorder %s14, 0
    %p113 = por %p111, %p112
    %p114 = scmp.ne.s32.totalorder %s100, %s101
    %p115 = scmp.eq.s32.totalorder %s15, 7
    %p116 = por %p114, %p115
    %p118 = scmp.ne.s32.totalorder %s101, %s117
    %p119 = scmp.eq.s32.totalorder %s15, 0
    %p120 = por %p118, %p119
    %p121 = scmp.le.s32.totalorder 1, %s9
    %p122 = scmp.lt.s32.totalorder %s9, 9
    %p123 = pnand %p121, %p122
    %p124 = pneg %p123
    // Predicated region
    $region9: #{_lambda_.16} parent=5 // pred_check
      _
    $region10: #{_lambda_.16} parent=5 // pred_check_branch
      %126 = sbr.rel (%p123) target = $region12
    $region11: #{_lambda_.16} parent=5 // pred_region
      %s127 = ssub.s32 %s9, 1
    $region12: #{_lambda_.16} parent=5 // pred_fallthru
      _
    %p128 = scmp.lt.s32.totalorder %s9, 8
    // Predicated region
    $region13: #{_lambda_.16} parent=5 // pred_check
      %p129 = pneg %p128
    $region14: #{_lambda_.16} parent=5 // pred_check_branch
      %131 = sbr.rel (%p129) target = $region16
    $region15: #{_lambda_.16} parent=5 // pred_region
      // Predicated region
      $region17: #{_lambda_.16} parent=15 // pred_check
        %p132 = pneg %p29
      $region18: #{_lambda_.16} parent=15 // pred_check_branch
        %134 = sbr.rel (%p132) target = $region20
      $region19: #{_lambda_.16} parent=15 // pred_region
        %p135 = scmp.lt.s32.totalorder %s9, 7
        %s136 = scalar_select %p135, %s9, 7
        %s137 = smul.addr %s136, 8
        %s138 = scalar_lea.vmem %s0, %s137
      $region20: #{_lambda_.16} parent=15 // pred_fallthru
        _
      // Predicated region
      $region21: #{_lambda_.16} parent=15 // pred_check
        %p139 = pneg %p55
      $region22: #{_lambda_.16} parent=15 // pred_check_branch
        %141 = sbr.rel (%p139) target = $region24
      $region23: #{_lambda_.16} parent=15 // pred_region
        %p142 = scmp.lt.s32.totalorder %s9, 7
        %s143 = scalar_select %p142, %s9, 7
        %s144 = smul.addr %s143, 8
        %s145 = scalar_lea.vmem %s1, %s144
      $region24: #{_lambda_.16} parent=15 // pred_fallthru
        _
      // Predicated region
      $region25: #{_lambda_.16} parent=15 // pred_check
        %p146 = pneg %p81
      $region26: #{_lambda_.16} parent=15 // pred_check_branch
        %148 = sbr.rel (%p146) target = $region28
      $region27: #{_lambda_.16} parent=15 // pred_region
        %p149 = scmp.lt.s32.totalorder %s9, 7
        %s150 = scalar_select %p149, %s9, 7
        %s151 = smul.addr %s150, 8
        %s152 = scalar_lea.vmem %s2, %s151
      $region28: #{_lambda_.16} parent=15 // pred_fallthru
        _
    $region16: #{_lambda_.16} parent=5 // pred_fallthru
      _
    %p153 = scmp.le.s32.totalorder 1, %s9
    %p154 = scmp.lt.s32.totalorder %s9, 9
    %p155 = pnand %p153, %p154
    %p156 = pneg %p155
    // Predicated region
    $region29: #{_lambda_.16} parent=5 // pred_check
      _
    $region30: #{_lambda_.16} parent=5 // pred_check_branch
      %158 = sbr.rel (%p155) target = $region32
    $region31: #{_lambda_.16} parent=5 // pred_region
      %s159 = ssub.s32 %s9, 1
      %p160 = scmp.lt.s32.totalorder %s14, 7
      %s161 = scalar_select %p160, %s14, 7
      %s162 = smul.addr %s161, 8
      %s163 = scalar_lea.vmem %s0, %s162
      %p164 = pneg %p35
      %p165 = pneg %p32
      %p166 = scmp.lt.s32.totalorder %s14, 7
      %s167 = scalar_select %p166, %s14, 7
      %s168 = smul.addr %s167, 8
      %s169 = scalar_lea.vmem %s1, %s168
      %p170 = pneg %p61
      %p171 = pneg %p58
      %p172 = scmp.lt.s32.totalorder %s14, 7
      %s173 = scalar_select %p172, %s14, 7
      %s174 = smul.addr %s173, 8
      %s175 = scalar_lea.vmem %s2, %s174
      %p176 = pneg %p87
      %p177 = pneg %p84
      %p178 = pneg %p113
      %p179 = pneg %p110
      %p180 = scmp.lt.s32.totalorder %s14, 7
      %s181 = scalar_select %p180, %s14, 7
      %s182 = smul.addr %s181, 8
      %s183 = scalar_lea.vmem %s3, %s182
      %p184 = scmp.lt.s32.totalorder %s14, 7
      %s185 = scalar_select %p184, %s14, 7
      %s186 = smul.addr %s185, 8
      %s187 = scalar_lea.vmem %s0, %s186
      %p188 = scmp.lt.s32.totalorder %s14, 7
      %s189 = scalar_select %p188, %s14, 7
      %s190 = smul.addr %s189, 8
      %s191 = scalar_lea.vmem %s1, %s190
      %p192 = scmp.lt.s32.totalorder %s14, 7
      %s193 = scalar_select %p192, %s14, 7
      %s194 = smul.addr %s193, 8
      %s195 = scalar_lea.vmem %s2, %s194
      %p196 = scmp.lt.s32.totalorder %s14, 7
      %s197 = scalar_select %p196, %s14, 7
      %s198 = smul.addr %s197, 8
      %s199 = scalar_lea.vmem %s3, %s198
      %v200 = vld [vmem:[%s187] sm:$0x1f]
      %v201 = vmul.f32 %v200, 0.35355338
      %v202 = vld [vmem:[%s191] sm:$0x1f]
      %v203 = vld [vmem:[%s195] sm:$0x1f]
      %vm204 = vcmask 64512
      %v206 = vsel %vm204, %v201, 0
      %v209 = vsel %vm204, %v202, 0
      %211 = vmatprep.subr.mxu0 0.0
      %212 = vmatpush1.xpose.msra.mxu0 %v209
      %213 = vmatprep.subr.mxu0 0.0
      %214 = vmatpush1.xpose.msra.mxu0 0.0
      %215 = vmatprep.subr.mxu0 0.0
      %216 = vmatpush1.xpose.msra.mxu0 0.0
      %217 = vmatprep.subr.mxu0 0.0
      %218 = vmatpush1.xpose.msra.mxu0 0.0
      %219 = vmatprep.subr.mxu0 0.0
      %220 = vmatpush1.xpose.msra.mxu0 0.0
      %221 = vmatprep.subr.mxu0 0.0
      %222 = vmatpush1.xpose.msra.mxu0 0.0
      %223 = vmatprep.subr.mxu0 0.0
      %224 = vmatpush1.xpose.msra.mxu0 0.0
      %225 = vmatprep.subr.mxu0 0.0
      %226 = vmatpush1.xpose.msra.mxu0 0.0
      %227 = vmatprep.subr.mxu0 0.0
      %228 = vmatpush1.xpose.msra.mxu0 0.0
      %229 = vmatprep.subr.mxu0 0.0
      %230 = vmatpush1.xpose.msra.mxu0 0.0
      %231 = vmatprep.subr.mxu0 0.0
      %232 = vmatpush1.xpose.msra.mxu0 0.0
      %233 = vmatprep.subr.mxu0 0.0
      %234 = vmatpush1.xpose.msra.mxu0 0.0
      %235 = vmatprep.subr.mxu0 0.0
      %236 = vmatpush1.xpose.msra.mxu0 0.0
      %237 = vmatprep.subr.mxu0 0.0
      %238 = vmatpush1.xpose.msra.mxu0 0.0
      %239 = vmatprep.subr.mxu0 0.0
      %240 = vmatpush1.xpose.msra.mxu0 0.0
      %241 = vmatprep.subr.mxu0 0.0
      %242 = vmatpush1.xpose.msra.mxu0 0.0
      %243 = vmatprep.subr.mxu0 0.0
      %244 = vmatpush1.xpose.msra.mxu0 0.0
      %245 = vmatprep.subr.mxu0 0.0
      %246 = vmatpush1.xpose.msra.mxu0 0.0
      %247 = vmatprep.subr.mxu0 0.0
      %248 = vmatpush1.xpose.msra.mxu0 0.0
      %249 = vmatprep.subr.mxu0 0.0
      %250 = vmatpush1.xpose.msra.mxu0 0.0
      %251 = vmatprep.subr.mxu0 0.0
      %252 = vmatpush1.xpose.msra.mxu0 0.0
      %253 = vmatprep.subr.mxu0 0.0
      %254 = vmatpush1.xpose.msra.mxu0 0.0
      %255 = vmatprep.subr.mxu0 0.0
      %256 = vmatpush1.xpose.msra.mxu0 0.0
      %257 = vmatprep.subr.mxu0 0.0
      %258 = vmatpush1.xpose.msra.mxu0 0.0
      %259 = vmatprep.subr.mxu0 0.0
      %260 = vmatpush1.xpose.msra.mxu0 0.0
      %261 = vmatprep.subr.mxu0 0.0
      %262 = vmatpush1.xpose.msra.mxu0 0.0
      %263 = vmatprep.subr.mxu0 0.0
      %264 = vmatpush1.xpose.msra.mxu0 0.0
      %265 = vmatprep.subr.mxu0 0.0
      %266 = vmatpush1.xpose.msra.mxu0 0.0
      %267 = vmatprep.subr.mxu0 0.0
      %268 = vmatpush1.xpose.msra.mxu0 0.0
      %269 = vmatprep.subr.mxu0 0.0
      %270 = vmatpush1.xpose.msra.mxu0 0.0
      %271 = vmatprep.subr.mxu0 0.0
      %272 = vmatpush1.xpose.msra.mxu0 0.0
      %273 = vmatprep.subr.mxu0 0.0
      %274 = vmatpush1.xpose.msra.mxu0 0.0
      %275 = vmatprep.mubr.f32.mxu0 0.0
      %276 = vmatmul.mubr.f32.gmra.mrb[0].mxu0 %v206
      %v277 = vpop.f32.mrb[0].mxu0
      %v278 = vadd.f32 0.0, %v277
      %v279 = vpop.f32.mrb[0].mxu0
      %280 = vdwg.mxu0
      %vm281 = vcmask 36864
      %v282 = vsel %vm281, %v278, -inf
      %283 = vmax.xlane.f32.xlu0 %v282
      %v284 = vpop.xlane.xlu0 %283
      %v285 = vsub.f32 %v278, %v284
      %v286 = vmul.f32 %v285, 1.442695
      %v287 = vpow.pop %v286
      %v288 = vsel %vm281, %v287, 0.0
      %289 = vadd.xlane.f32.xlu0 %v288
      %v290 = vpop.xlane.xlu0 %289
      %v291 = vrcp.pop %v290
      %v292 = vmul.f32 %v287, %v291
      %vm293 = vcmask 39936
      %v295 = vsel %vm293, %v292, 0
      %vm297 = vcmask 1044480
      %v299 = vsel %vm297, %v203, 0
      %301 = vmatprep.subr.mxu0 0.0
      %302 = vmatpush1.msra.mxu0 %v299
      %303 = vmatprep.subr.mxu0 0.0
      %304 = vmatpush1.msra.mxu0 0.0
      %305 = vmatprep.subr.mxu0 0.0
      %306 = vmatpush1.msra.mxu0 0.0
      %307 = vmatprep.subr.mxu0 0.0
      %308 = vmatpush1.msra.mxu0 0.0
      %309 = vmatprep.subr.mxu0 0.0
      %310 = vmatpush1.msra.mxu0 0.0
      %311 = vmatprep.subr.mxu0 0.0
      %312 = vmatpush1.msra.mxu0 0.0
      %313 = vmatprep.subr.mxu0 0.0
      %314 = vmatpush1.msra.mxu0 0.0
      %315 = vmatprep.subr.mxu0 0.0
      %316 = vmatpush1.msra.mxu0 0.0
      %317 = vmatprep.subr.mxu0 0.0
      %318 = vmatpush1.msra.mxu0 0.0
      %319 = vmatprep.subr.mxu0 0.0
      %320 = vmatpush1.msra.mxu0 0.0
      %321 = vmatprep.subr.mxu0 0.0
      %322 = vmatpush1.msra.mxu0 0.0
      %323 = vmatprep.subr.mxu0 0.0
      %324 = vmatpush1.msra.mxu0 0.0
      %325 = vmatprep.subr.mxu0 0.0
      %326 = vmatpush1.msra.mxu0 0.0
      %327 = vmatprep.subr.mxu0 0.0
      %328 = vmatpush1.msra.mxu0 0.0
      %329 = vmatprep.subr.mxu0 0.0
      %330 = vmatpush1.msra.mxu0 0.0
      %331 = vmatprep.subr.mxu0 0.0
      %332 = vmatpush1.msra.mxu0 0.0
      %333 = vmatprep.subr.mxu0 0.0
      %334 = vmatpush1.msra.mxu0 0.0
      %335 = vmatprep.subr.mxu0 0.0
      %336 = vmatpush1.msra.mxu0 0.0
      %337 = vmatprep.subr.mxu0 0.0
      %338 = vmatpush1.msra.mxu0 0.0
      %339 = vmatprep.subr.mxu0 0.0
      %340 = vmatpush1.msra.mxu0 0.0
      %341 = vmatprep.subr.mxu0 0.0
      %342 = vmatpush1.msra.mxu0 0.0
      %343 = vmatprep.subr.mxu0 0.0
      %344 = vmatpush1.msra.mxu0 0.0
      %345 = vmatprep.subr.mxu0 0.0
      %346 = vmatpush1.msra.mxu0 0.0
      %347 = vmatprep.subr.mxu0 0.0
      %348 = vmatpush1.msra.mxu0 0.0
      %349 = vmatprep.subr.mxu0 0.0
      %350 = vmatpush1.msra.mxu0 0.0
      %351 = vmatprep.subr.mxu0 0.0
      %352 = vmatpush1.msra.mxu0 0.0
      %353 = vmatprep.subr.mxu0 0.0
      %354 = vmatpush1.msra.mxu0 0.0
      %355 = vmatprep.subr.mxu0 0.0
      %356 = vmatpush1.msra.mxu0 0.0
      %357 = vmatprep.subr.mxu0 0.0
      %358 = vmatpush1.msra.mxu0 0.0
      %359 = vmatprep.subr.mxu0 0.0
      %360 = vmatpush1.msra.mxu0 0.0
      %361 = vmatprep.subr.mxu0 0.0
      %362 = vmatpush1.msra.mxu0 0.0
      %363 = vmatprep.subr.mxu0 0.0
      %364 = vmatpush1.msra.mxu0 0.0
      %365 = vmatprep.mubr.f32.mxu0 0.0
      %366 = vmatmul.mubr.f32.gmra.mrb[0].mxu0 %v295
      %v367 = vpop.f32.mrb[0].mxu0
      %v368 = vadd.f32 0.0, %v367
      %v369 = vpop.f32.mrb[0].mxu0
      %370 = vdwg.mxu0
      %vm371 = vcmask 61440
      %372 = vst.msk [vmem:[%s199] sm:$0x1f] %vm371, %v368
      %p373 = scmp.lt.s32.totalorder %s14, 7
      %s374 = scalar_select %p373, %s14, 7
      %s375 = smul.addr %s374, 8
      %s376 = scalar_lea.vmem %s3, %s375
      // Predicated region
      $region33: #{_lambda_.16} parent=31 // pred_check
        %p377 = pneg %p110
      $region34: #{_lambda_.16} parent=31 // pred_check_branch
        %379 = sbr.rel (%p377) target = $region36
      $region35: #{_lambda_.16} parent=31 // pred_region
        _
      $region36: #{_lambda_.16} parent=31 // pred_fallthru
        _
    $region32: #{_lambda_.16} parent=5 // pred_fallthru
      _
    %p380 = scmp.le.s32.totalorder 2, %s9
    // Predicated region
    $region37: #{_lambda_.16} parent=5 // pred_check
      %p381 = pneg %p380
    $region38: #{_lambda_.16} parent=5 // pred_check_branch
      %383 = sbr.rel (%p381) target = $region40
    $region39: #{_lambda_.16} parent=5 // pred_region
      %s384 = ssub.s32 %s9, 2
      // Predicated region
      $region41: #{_lambda_.16} parent=39 // pred_check
        %p385 = pneg %p116
      $region42: #{_lambda_.16} parent=39 // pred_check_branch
        %387 = sbr.rel (%p385) target = $region44
      $region43: #{_lambda_.16} parent=39 // pred_region
        %p388 = scmp.lt.s32.totalorder %s15, 7
        %s389 = scalar_select %p388, %s15, 7
        %s390 = smul.addr %s389, 8
        %s391 = scalar_lea.vmem %s3, %s390
      $region44: #{_lambda_.16} parent=39 // pred_fallthru
        _
    $region40: #{_lambda_.16} parent=5 // pred_fallthru
      _
  $region6: #{_lambda_.16} parent=0 // loop_footer
    %s13 = sadd.s32 1, %s9
  $region7: #{_lambda_.16} parent=0 // loop_footer_branch
    %8 = sbr.rel target = $region3
  $region8: #{_lambda_.16} parent=0 // loop_exit
    _

// kernel: _lambda_.13
$region0: #{_lambda_.13}
  #allocation0 [shape = 'u32[]', space=smem, size = 0x4, offset = 0x4, fixed_abs, tag = 'smem constant byte address 0x4 - core index']
  #allocation1 [shape = 'u32[144,128]{1,0:T(1,128)}', space=vmem, size = 0x12000, scoped, tag = 'internal scratch']
  #allocation2 [shape = 'f32[8,32]{1,0:T(8,128)}', space=vmem, size = 0x1000, scoped, tag = 'scratch operand']
  %s0 = inlined_call_operand.vmem [shape: f32[8,192], index: 0, kind: input, shape index: {}]
  %s1 = inlined_call_operand.vmem [shape: f32[192,32], index: 1, kind: input, shape index: {}]
  %s2 = inlined_call_operand.vmem [shape: f32[8,32], index: 2, kind: output, shape index: {}]
  %s3 = sld [smem:[#allocation0]]
  $region26: #{_lambda_.13} parent=0
    _
  %s5 = ssub.s32 1, %s3
  %s6 = scalar_select 0, %s5, %s3
  // Predicated region
  $region2: #{_lambda_.13} parent=0 // pred_check
    _
  $region3: #{_lambda_.13} parent=0 // pred_check_branch
    %8 = sbr.rel (0) target = $region5
  $region4: #{_lambda_.13} parent=0 // pred_region
    _
  $region5: #{_lambda_.13} parent=0 // pred_fallthru
    _
  // Predicated region
  $region6: #{_lambda_.13} parent=0 // pred_check
    _
  $region7: #{_lambda_.13} parent=0 // pred_check_branch
    %10 = sbr.rel (0) target = $region9
  $region8: #{_lambda_.13} parent=0 // pred_region
    _
  $region9: #{_lambda_.13} parent=0 // pred_fallthru
    _
  %p11 = scmp.eq.s32.totalorder 0, 0
  // Predicated region
  $region10: #{_lambda_.13} parent=0 // pred_check
    %p12 = pneg %p11
  $region11: #{_lambda_.13} parent=0 // pred_check_branch
    %14 = sbr.rel (%p12) target = $region13
  $region12: #{_lambda_.13} parent=0 // pred_region
    %vm15 = vcmask 261120
    %16 = vst.msk [vmem:[#allocation2] sm:$0xff] %vm15, 0.0
  $region13: #{_lambda_.13} parent=0 // pred_fallthru
    _
  %v17 = vld [vmem:[#allocation2] sm:$0xff]
  %v18 = vld [vmem:[%s0] sm:$0xff]
  %v19 = vld [vmem:[%s0 + $0x8] sm:$0xff]
  %v20 = vld [vmem:[%s1] sm:$0xff]
  %v21 = vld [vmem:[%s1 + $0x8] sm:$0xff]
  %v22 = vld [vmem:[%s1 + $0x10] sm:$0xff]
  %v23 = vld [vmem:[%s1 + $0x18] sm:$0xff]
  %v24 = vld [vmem:[%s1 + $0x20] sm:$0xff]
  %v25 = vld [vmem:[%s1 + $0x28] sm:$0xff]
  %v26 = vld [vmem:[%s1 + $0x30] sm:$0xff]
  %v27 = vld [vmem:[%s1 + $0x38] sm:$0xff]
  %v28 = vld [vmem:[%s1 + $0x40] sm:$0xff]
  %v29 = vld [vmem:[%s1 + $0x48] sm:$0xff]
  %v30 = vld [vmem:[%s1 + $0x50] sm:$0xff]
  %v31 = vld [vmem:[%s1 + $0x58] sm:$0xff]
  %v32 = vld [vmem:[%s1 + $0x60] sm:$0xff]
  %v33 = vld [vmem:[%s1 + $0x68] sm:$0xff]
  %v34 = vld [vmem:[%s1 + $0x70] sm:$0xff]
  %v35 = vld [vmem:[%s1 + $0x78] sm:$0xff]
  %v36 = vld [vmem:[%s1 + $0x80] sm:$0xff]
  %v37 = vld [vmem:[%s1 + $0x88] sm:$0xff]
  %v38 = vld [vmem:[%s1 + $0x90] sm:$0xff]
  %v39 = vld [vmem:[%s1 + $0x98] sm:$0xff]
  %v40 = vld [vmem:[%s1 + $0xa0] sm:$0xff]
  %v41 = vld [vmem:[%s1 + $0xa8] sm:$0xff]
  %v42 = vld [vmem:[%s1 + $0xb0] sm:$0xff]
  %v43 = vld [vmem:[%s1 + $0xb8] sm:$0xff]
  %vm44 = vcmask 523264
  %v46 = vsel %vm44, %v19, 0
  %48 = vmatprep.subr.mxu0 0.0
  %49 = vmatpush1.msra.mxu0 %v20
  %50 = vmatprep.subr.mxu0 0.0
  %51 = vmatpush1.msra.mxu0 %v21
  %52 = vmatprep.subr.mxu0 0.0
  %53 = vmatpush1.msra.mxu0 %v22
  %54 = vmatprep.subr.mxu0 0.0
  %55 = vmatpush1.msra.mxu0 %v23
  %56 = vmatprep.subr.mxu0 0.0
  %57 = vmatpush1.msra.mxu0 %v24
  %58 = vmatprep.subr.mxu0 0.0
  %59 = vmatpush1.msra.mxu0 %v25
  %60 = vmatprep.subr.mxu0 0.0
  %61 = vmatpush1.msra.mxu0 %v26
  %62 = vmatprep.subr.mxu0 0.0
  %63 = vmatpush1.msra.mxu0 %v27
  %64 = vmatprep.subr.mxu0 0.0
  %65 = vmatpush1.msra.mxu0 %v28
  %66 = vmatprep.subr.mxu0 0.0
  %67 = vmatpush1.msra.mxu0 %v29
  %68 = vmatprep.subr.mxu0 0.0
  %69 = vmatpush1.msra.mxu0 %v30
  %70 = vmatprep.subr.mxu0 0.0
  %71 = vmatpush1.msra.mxu0 %v31
  %72 = vmatprep.subr.mxu0 0.0
  %73 = vmatpush1.msra.mxu0 %v32
  %74 = vmatprep.subr.mxu0 0.0
  %75 = vmatpush1.msra.mxu0 %v33
  %76 = vmatprep.subr.mxu0 0.0
  %77 = vmatpush1.msra.mxu0 %v34
  %78 = vmatprep.subr.mxu0 0.0
  %79 = vmatpush1.msra.mxu0 %v35
  %80 = vmatprep.subr.mxu0 0.0
  %81 = vmatpush1.msra.mxu0 %v36
  %82 = vmatprep.subr.mxu0 0.0
  %83 = vmatpush1.msra.mxu0 %v37
  %84 = vmatprep.subr.mxu0 0.0
  %85 = vmatpush1.msra.mxu0 %v38
  %86 = vmatprep.subr.mxu0 0.0
  %87 = vmatpush1.msra.mxu0 %v39
  %88 = vmatprep.subr.mxu0 0.0
  %89 = vmatpush1.msra.mxu0 %v40
  %90 = vmatprep.subr.mxu0 0.0
  %91 = vmatpush1.msra.mxu0 %v41
  %92 = vmatprep.subr.mxu0 0.0
  %93 = vmatpush1.msra.mxu0 %v42
  %94 = vmatprep.subr.mxu0 0.0
  %95 = vmatpush1.msra.mxu0 %v43
  %96 = vmatprep.subr.mxu0 0.0
  %97 = vmatpush1.msra.mxu0 0.0
  %98 = vmatprep.subr.mxu0 0.0
  %99 = vmatpush1.msra.mxu0 0.0
  %100 = vmatprep.subr.mxu0 0.0
  %101 = vmatpush1.msra.mxu0 0.0
  %102 = vmatprep.subr.mxu0 0.0
  %103 = vmatpush1.msra.mxu0 0.0
  %104 = vmatprep.subr.mxu0 0.0
  %105 = vmatpush1.msra.mxu0 0.0
  %106 = vmatprep.subr.mxu0 0.0
  %107 = vmatpush1.msra.mxu0 0.0
  %108 = vmatprep.subr.mxu0 0.0
  %109 = vmatpush1.msra.mxu0 0.0
  %110 = vmatprep.subr.mxu0 0.0
  %111 = vmatpush1.msra.mxu0 0.0
  %112 = vmatprep.mubr.f32.mxu0 %v46
  %113 = vmatmul.mubr.f32.gmra.mrb[0].mxu0 %v18
  %v114 = vpop.f32.mrb[0].mxu0
  %v115 = vadd.f32 0.0, %v114
  %v116 = vpop.f32.mrb[0].mxu0
  %117 = vdwg.mxu0
  %v118 = vadd.f32 %v17, %v115
  %vm119 = vcmask 261120
  %120 = vst.msk [vmem:[#allocation2] sm:$0xff] %vm119, %v118
  // Predicated region
  $region14: #{_lambda_.13} parent=0 // pred_check
    %p121 = pneg %p11
  $region15: #{_lambda_.13} parent=0 // pred_check_branch
    %123 = sbr.rel (%p121) target = $region17
  $region16: #{_lambda_.13} parent=0 // pred_region
    %v124 = vld [vmem:[#allocation2] sm:$0xff]
    %125 = vst.msk [vmem:[%s2] sm:$0xff] %vm119, %v124
  $region17: #{_lambda_.13} parent=0 // pred_fallthru
    _
  // Predicated region
  $region18: #{_lambda_.13} parent=0 // pred_check
    _
  $region19: #{_lambda_.13} parent=0 // pred_check_branch
    %127 = sbr.rel (0) target = $region21
  $region20: #{_lambda_.13} parent=0 // pred_region
    _
  $region21: #{_lambda_.13} parent=0 // pred_fallthru
    _
  // Predicated region
  $region22: #{_lambda_.13} parent=0 // pred_check
    _
  $region23: #{_lambda_.13} parent=0 // pred_check_branch
    %129 = sbr.rel (0) target = $region25
  $region24: #{_lambda_.13} parent=0 // pred_region
    _
  $region25: #{_lambda_.13} parent=0 // pred_fallthru
    _

// kernel: _lambda_.15
$region0: #{_lambda_.15}
  #allocation0 [shape = 'u32[]', space=smem, size = 0x4, offset = 0x4, fixed_abs, tag = 'smem constant byte address 0x4 - core index']
  #allocation1 [shape = 'u32[144,128]{1,0:T(1,128)}', space=vmem, size = 0x12000, scoped, tag = 'internal scratch']
  %s0 = inlined_call_operand.vmem [shape: f32[10,32], index: 0, kind: input, shape index: {}]
  %s1 = inlined_call_operand.vmem [shape: f32[1,32], index: 1, kind: input, shape index: {}]
  %s2 = inlined_call_operand.vmem [shape: f32[1,32], index: 2, kind: input, shape index: {}]
  %s3 = inlined_call_operand.vmem [shape: f32[32,96], index: 3, kind: input, shape index: {}]
  %s4 = inlined_call_operand.vmem [shape: f32[1,96], index: 4, kind: input, shape index: {}]
  %s5 = inlined_call_operand.vmem [shape: f32[10,96], index: 5, kind: output, shape index: {}]
  %s6 = sld [smem:[#allocation0]]
  $region30: #{_lambda_.15} parent=0
    _
  %s8 = ssub.s32 1, %s6
  %s9 = scalar_select 0, %s8, %s6
  // Predicated region
  $region2: #{_lambda_.15} parent=0 // pred_check
    _
  $region3: #{_lambda_.15} parent=0 // pred_check_branch
    %11 = sbr.rel (0) target = $region5
  $region4: #{_lambda_.15} parent=0 // pred_region
    _
  $region5: #{_lambda_.15} parent=0 // pred_fallthru
    _
  // Predicated region
  $region6: #{_lambda_.15} parent=0 // pred_check
    _
  $region7: #{_lambda_.15} parent=0 // pred_check_branch
    %13 = sbr.rel (0) target = $region9
  $region8: #{_lambda_.15} parent=0 // pred_region
    _
  $region9: #{_lambda_.15} parent=0 // pred_fallthru
    _
  // Predicated region
  $region10: #{_lambda_.15} parent=0 // pred_check
    _
  $region11: #{_lambda_.15} parent=0 // pred_check_branch
    %15 = sbr.rel (0) target = $region13
  $region12: #{_lambda_.15} parent=0 // pred_region
    _
  $region13: #{_lambda_.15} parent=0 // pred_fallthru
    _
  // Predicated region
  $region14: #{_lambda_.15} parent=0 // pred_check
    _
  $region15: #{_lambda_.15} parent=0 // pred_check_branch
    %17 = sbr.rel (0) target = $region17
  $region16: #{_lambda_.15} parent=0 // pred_region
    _
  $region17: #{_lambda_.15} parent=0 // pred_fallthru
    _
  // Predicated region
  $region18: #{_lambda_.15} parent=0 // pred_check
    _
  $region19: #{_lambda_.15} parent=0 // pred_check_branch
    %19 = sbr.rel (0) target = $region21
  $region20: #{_lambda_.15} parent=0 // pred_region
    _
  $region21: #{_lambda_.15} parent=0 // pred_fallthru
    _
  %v20 = vld [vmem:[%s0] sm:$0xff]
  %v21 = vld [vmem:[%s0 + $0x8] sm:$0x3]
  %vm22 = vcmask 261120
  %v23 = vsel %vm22, %v20, 0.0
  %24 = vadd.xlane.f32.xlu0 %v23
  %v25 = vpop.xlane.xlu0 %24
  %vm26 = vcmask 254976
  %v27 = vsel %vm26, %v21, 0.0
  %28 = vadd.xlane.f32.xlu0 %v27
  %v29 = vpop.xlane.xlu0 %28
  %v30 = vrcp.pop 32.0
  %v31 = vmul.f32 %v25, %v30
  %v32 = vmul.f32 %v29, %v30
  %v33 = vsub.f32 %v20, %v31
  %v34 = vsub.f32 %v21, %v32
  %v35 = vmul.f32 %v33, %v33
  %v36 = vmul.f32 %v34, %v34
  %v37 = vsel %vm22, %v35, 0.0
  %38 = vadd.xlane.f32.xlu0 %v37
  %v39 = vpop.xlane.xlu0 %38
  %v40 = vsel %vm26, %v36, 0.0
  %41 = vadd.xlane.f32.xlu0 %v40
  %v42 = vpop.xlane.xlu0 %41
  %v43 = vmul.f32 %v39, %v30
  %v44 = vmul.f32 %v42, %v30
  %v45 = vadd.f32 %v43, 1e-05
  %v46 = vadd.f32 %v44, 1e-05
  %v47 = vrsqrt.pop %v45
  %v48 = vrsqrt.pop %v46
  %v49 = vmul.f32 %v33, %v47
  %v50 = vmul.f32 %v34, %v48
  %v51 = vld [vmem:[%s1] sm:$0x1]
  %v53 = vlaneseq
  %v54 = vshrl.u32 %v53, 7
  %v55 = vsub.s32 0, %v54
  %v56 = vrot.slane %v51, %v55
  %v58 = vmul.f32 %v49, %v56
  %v59 = vmul.f32 %v50, %v56
  %v60 = vld [vmem:[%s2] sm:$0x1]
  %v62 = vlaneseq
  %v63 = vshrl.u32 %v62, 7
  %v64 = vsub.s32 0, %v63
  %v65 = vrot.slane %v60, %v64
  %v67 = vadd.f32 %v58, %v65
  %v68 = vadd.f32 %v59, %v65
  %v69 = vld [vmem:[%s3] sm:$0xff]
  %v70 = vld [vmem:[%s3 + $0x8] sm:$0xff]
  %v71 = vld [vmem:[%s3 + $0x10] sm:$0xff]
  %v72 = vld [vmem:[%s3 + $0x18] sm:$0xff]
  %v73 = vld [vmem:[%s4] sm:$0x1]
  %v75 = vlaneseq
  %v76 = vshrl.u32 %v75, 7
  %v77 = vsub.s32 0, %v76
  %v78 = vrot.slane %v73, %v77
  %v81 = vsel %vm22, %v67, 0
  %v84 = vsel %vm22, %v68, 0
  %86 = vmatprep.subr.mxu0 0.0
  %87 = vmatpush1.msra.mxu0 %v69
  %88 = vmatprep.subr.mxu0 0.0
  %89 = vmatpush1.msra.mxu0 %v70
  %90 = vmatprep.subr.mxu0 0.0
  %91 = vmatpush1.msra.mxu0 %v71
  %92 = vmatprep.subr.mxu0 0.0
  %93 = vmatpush1.msra.mxu0 %v72
  %94 = vmatprep.subr.mxu0 0.0
  %95 = vmatpush1.msra.mxu0 0.0
  %96 = vmatprep.subr.mxu0 0.0
  %97 = vmatpush1.msra.mxu0 0.0
  %98 = vmatprep.subr.mxu0 0.0
  %99 = vmatpush1.msra.mxu0 0.0
  %100 = vmatprep.subr.mxu0 0.0
  %101 = vmatpush1.msra.mxu0 0.0
  %102 = vmatprep.subr.mxu0 0.0
  %103 = vmatpush1.msra.mxu0 0.0
  %104 = vmatprep.subr.mxu0 0.0
  %105 = vmatpush1.msra.mxu0 0.0
  %106 = vmatprep.subr.mxu0 0.0
  %107 = vmatpush1.msra.mxu0 0.0
  %108 = vmatprep.subr.mxu0 0.0
  %109 = vmatpush1.msra.mxu0 0.0
  %110 = vmatprep.subr.mxu0 0.0
  %111 = vmatpush1.msra.mxu0 0.0
  %112 = vmatprep.subr.mxu0 0.0
  %113 = vmatpush1.msra.mxu0 0.0
  %114 = vmatprep.subr.mxu0 0.0
  %115 = vmatpush1.msra.mxu0 0.0
  %116 = vmatprep.subr.mxu0 0.0
  %117 = vmatpush1.msra.mxu0 0.0
  %118 = vmatprep.subr.mxu0 0.0
  %119 = vmatpush1.msra.mxu0 0.0
  %120 = vmatprep.subr.mxu0 0.0
  %121 = vmatpush1.msra.mxu0 0.0
  %122 = vmatprep.subr.mxu0 0.0
  %123 = vmatpush1.msra.mxu0 0.0
  %124 = vmatprep.subr.mxu0 0.0
  %125 = vmatpush1.msra.mxu0 0.0
  %126 = vmatprep.subr.mxu0 0.0
  %127 = vmatpush1.msra.mxu0 0.0
  %128 = vmatprep.subr.mxu0 0.0
  %129 = vmatpush1.msra.mxu0 0.0
  %130 = vmatprep.subr.mxu0 0.0
  %131 = vmatpush1.msra.mxu0 0.0
  %132 = vmatprep.subr.mxu0 0.0
  %133 = vmatpush1.msra.mxu0 0.0
  %134 = vmatprep.subr.mxu0 0.0
  %135 = vmatpush1.msra.mxu0 0.0
  %136 = vmatprep.subr.mxu0 0.0
  %137 = vmatpush1.msra.mxu0 0.0
  %138 = vmatprep.subr.mxu0 0.0
  %139 = vmatpush1.msra.mxu0 0.0
  %140 = vmatprep.subr.mxu0 0.0
  %141 = vmatpush1.msra.mxu0 0.0
  %142 = vmatprep.subr.mxu0 0.0
  %143 = vmatpush1.msra.mxu0 0.0
  %144 = vmatprep.subr.mxu0 0.0
  %145 = vmatpush1.msra.mxu0 0.0
  %146 = vmatprep.subr.mxu0 0.0
  %147 = vmatpush1.msra.mxu0 0.0
  %148 = vmatprep.subr.mxu0 0.0
  %149 = vmatpush1.msra.mxu0 0.0
  %150 = vmatprep.mubr.f32.mxu0 0.0
  %151 = vmatmul.mubr.f32.gmra.mrb[0].mxu0 %v81
  %v152 = vpop.f32.mrb[0].mxu0
  %v153 = vadd.f32 %v78, %v152
  %v154 = vpop.f32.mrb[0].mxu0
  %155 = vmatprep.mubr.f32.mxu0 0.0
  %156 = vmatmul.mubr.f32.gmra.mrb[0].mxu0 %v84
  %v157 = vpop.f32.mrb[0].mxu0
  %v158 = vadd.f32 %v78, %v157
  %v159 = vpop.f32.mrb[0].mxu0
  %160 = vdwg.mxu0
  %vm161 = vcmask 785408
  %162 = vst.msk [vmem:[%s5] sm:$0xff] %vm161, %v153
  %vm163 = vcmask 779264
  %164 = vst.msk [vmem:[%s5 + $0x8] sm:$0x3] %vm163, %v158
  // Predicated region
  $region22: #{_lambda_.15} parent=0 // pred_check
    _
  $region23: #{_lambda_.15} parent=0 // pred_check_branch
    %166 = sbr.rel (0) target = $region25
  $region24: #{_lambda_.15} parent=0 // pred_region
    _
  $region25: #{_lambda_.15} parent=0 // pred_fallthru
    _
  // Predicated region
  $region26: #{_lambda_.15} parent=0 // pred_check
    _
  $region27: #{_lambda_.15} parent=0 // pred_check_branch
    %168 = sbr.rel (0) target = $region29
  $region28: #{_lambda_.15} parent=0 // pred_region
    _
  $region29: #{_lambda_.15} parent=0 // pred_fallthru
    _

// kernel: _lambda_.17
$region0: #{_lambda_.17}
  #allocation0 [shape = 'u32[]', space=smem, size = 0x4, offset = 0x4, fixed_abs, tag = 'smem constant byte address 0x4 - core index']
  #allocation1 [shape = 'u32[144,128]{1,0:T(1,128)}', space=vmem, size = 0x12000, scoped, tag = 'internal scratch']
  #allocation2 [shape = 'f32[10,32]{1,0:T(8,128)}', space=vmem, size = 0x2000, scoped, tag = 'scratch operand']
  %s0 = inlined_call_operand.vmem [shape: f32[10,32], index: 0, kind: input, shape index: {}]
  %s1 = inlined_call_operand.vmem [shape: f32[32,32], index: 1, kind: input, shape index: {}]
  %s2 = inlined_call_operand.vmem [shape: f32[1,32], index: 2, kind: input, shape index: {}]
  %s3 = inlined_call_operand.vmem [shape: f32[10,32], index: 3, kind: input, shape index: {}]
  %s4 = inlined_call_operand.vmem [shape: f32[10,32], index: 4, kind: output, shape index: {}]
  %s5 = sld [smem:[#allocation0]]
  $region34: #{_lambda_.17} parent=0
    _
  %s7 = ssub.s32 1, %s5
  %s8 = scalar_select 0, %s7, %s5
  // Predicated region
  $region2: #{_lambda_.17} parent=0 // pred_check
    _
  $region3: #{_lambda_.17} parent=0 // pred_check_branch
    %10 = sbr.rel (0) target = $region5
  $region4: #{_lambda_.17} parent=0 // pred_region
    _
  $region5: #{_lambda_.17} parent=0 // pred_fallthru
    _
  // Predicated region
  $region6: #{_lambda_.17} parent=0 // pred_check
    _
  $region7: #{_lambda_.17} parent=0 // pred_check_branch
    %12 = sbr.rel (0) target = $region9
  $region8: #{_lambda_.17} parent=0 // pred_region
    _
  $region9: #{_lambda_.17} parent=0 // pred_fallthru
    _
  // Predicated region
  $region10: #{_lambda_.17} parent=0 // pred_check
    _
  $region11: #{_lambda_.17} parent=0 // pred_check_branch
    %14 = sbr.rel (0) target = $region13
  $region12: #{_lambda_.17} parent=0 // pred_region
    _
  $region13: #{_lambda_.17} parent=0 // pred_fallthru
    _
  // Predicated region
  $region14: #{_lambda_.17} parent=0 // pred_check
    _
  $region15: #{_lambda_.17} parent=0 // pred_check_branch
    %16 = sbr.rel (0) target = $region17
  $region16: #{_lambda_.17} parent=0 // pred_region
    _
  $region17: #{_lambda_.17} parent=0 // pred_fallthru
    _
  %p17 = scmp.eq.s32.totalorder 0, 0
  // Predicated region
  $region18: #{_lambda_.17} parent=0 // pred_check
    %p18 = pneg %p17
  $region19: #{_lambda_.17} parent=0 // pred_check_branch
    %20 = sbr.rel (%p18) target = $region21
  $region20: #{_lambda_.17} parent=0 // pred_region
    %vm21 = vcmask 261120
    %22 = vst.msk [vmem:[#allocation2] sm:$0xff] %vm21, 0.0
    %vm23 = vcmask 254976
    %24 = vst.msk [vmem:[#allocation2 + $0x8] sm:$0x3] %vm23, 0.0
  $region21: #{_lambda_.17} parent=0 // pred_fallthru
    _
  %v25 = vld [vmem:[#allocation2] sm:$0xff]
  %v26 = vld [vmem:[#allocation2 + $0x8] sm:$0x3]
  %v27 = vld [vmem:[%s0] sm:$0xff]
  %v28 = vld [vmem:[%s0 + $0x8] sm:$0x3]
  %v29 = vld [vmem:[%s1] sm:$0xff]
  %v30 = vld [vmem:[%s1 + $0x8] sm:$0xff]
  %v31 = vld [vmem:[%s1 + $0x10] sm:$0xff]
  %v32 = vld [vmem:[%s1 + $0x18] sm:$0xff]
  %vm33 = vcmask 261120
  %v35 = vsel %vm33, %v27, 0
  %v38 = vsel %vm33, %v28, 0
  %40 = vmatprep.subr.mxu0 0.0
  %41 = vmatpush1.msra.mxu0 %v29
  %42 = vmatprep.subr.mxu0 0.0
  %43 = vmatpush1.msra.mxu0 %v30
  %44 = vmatprep.subr.mxu0 0.0
  %45 = vmatpush1.msra.mxu0 %v31
  %46 = vmatprep.subr.mxu0 0.0
  %47 = vmatpush1.msra.mxu0 %v32
  %48 = vmatprep.subr.mxu0 0.0
  %49 = vmatpush1.msra.mxu0 0.0
  %50 = vmatprep.subr.mxu0 0.0
  %51 = vmatpush1.msra.mxu0 0.0
  %52 = vmatprep.subr.mxu0 0.0
  %53 = vmatpush1.msra.mxu0 0.0
  %54 = vmatprep.subr.mxu0 0.0
  %55 = vmatpush1.msra.mxu0 0.0
  %56 = vmatprep.subr.mxu0 0.0
  %57 = vmatpush1.msra.mxu0 0.0
  %58 = vmatprep.subr.mxu0 0.0
  %59 = vmatpush1.msra.mxu0 0.0
  %60 = vmatprep.subr.mxu0 0.0
  %61 = vmatpush1.msra.mxu0 0.0
  %62 = vmatprep.subr.mxu0 0.0
  %63 = vmatpush1.msra.mxu0 0.0
  %64 = vmatprep.subr.mxu0 0.0
  %65 = vmatpush1.msra.mxu0 0.0
  %66 = vmatprep.subr.mxu0 0.0
  %67 = vmatpush1.msra.mxu0 0.0
  %68 = vmatprep.subr.mxu0 0.0
  %69 = vmatpush1.msra.mxu0 0.0
  %70 = vmatprep.subr.mxu0 0.0
  %71 = vmatpush1.msra.mxu0 0.0
  %72 = vmatprep.subr.mxu0 0.0
  %73 = vmatpush1.msra.mxu0 0.0
  %74 = vmatprep.subr.mxu0 0.0
  %75 = vmatpush1.msra.mxu0 0.0
  %76 = vmatprep.subr.mxu0 0.0
  %77 = vmatpush1.msra.mxu0 0.0
  %78 = vmatprep.subr.mxu0 0.0
  %79 = vmatpush1.msra.mxu0 0.0
  %80 = vmatprep.subr.mxu0 0.0
  %81 = vmatpush1.msra.mxu0 0.0
  %82 = vmatprep.subr.mxu0 0.0
  %83 = vmatpush1.msra.mxu0 0.0
  %84 = vmatprep.subr.mxu0 0.0
  %85 = vmatpush1.msra.mxu0 0.0
  %86 = vmatprep.subr.mxu0 0.0
  %87 = vmatpush1.msra.mxu0 0.0
  %88 = vmatprep.subr.mxu0 0.0
  %89 = vmatpush1.msra.mxu0 0.0
  %90 = vmatprep.subr.mxu0 0.0
  %91 = vmatpush1.msra.mxu0 0.0
  %92 = vmatprep.subr.mxu0 0.0
  %93 = vmatpush1.msra.mxu0 0.0
  %94 = vmatprep.subr.mxu0 0.0
  %95 = vmatpush1.msra.mxu0 0.0
  %96 = vmatprep.subr.mxu0 0.0
  %97 = vmatpush1.msra.mxu0 0.0
  %98 = vmatprep.subr.mxu0 0.0
  %99 = vmatpush1.msra.mxu0 0.0
  %100 = vmatprep.subr.mxu0 0.0
  %101 = vmatpush1.msra.mxu0 0.0
  %102 = vmatprep.subr.mxu0 0.0
  %103 = vmatpush1.msra.mxu0 0.0
  %104 = vmatprep.mubr.f32.mxu0 0.0
  %105 = vmatmul.mubr.f32.gmra.mrb[0].mxu0 %v35
  %v106 = vpop.f32.mrb[0].mxu0
  %v107 = vadd.f32 0.0, %v106
  %v108 = vpop.f32.mrb[0].mxu0
  %109 = vmatprep.mubr.f32.mxu0 0.0
  %110 = vmatmul.mubr.f32.gmra.mrb[0].mxu0 %v38
  %v111 = vpop.f32.mrb[0].mxu0
  %v112 = vadd.f32 0.0, %v111
  %v113 = vpop.f32.mrb[0].mxu0
  %114 = vdwg.mxu0
  %v115 = vadd.f32 %v25, %v107
  %v116 = vadd.f32 %v26, %v112
  %117 = vst.msk [vmem:[#allocation2] sm:$0xff] %vm33, %v115
  %vm118 = vcmask 254976
  %119 = vst.msk [vmem:[#allocation2 + $0x8] sm:$0x3] %vm118, %v116
  // Predicated region
  $region22: #{_lambda_.17} parent=0 // pred_check
    %p120 = pneg %p17
  $region23: #{_lambda_.17} parent=0 // pred_check_branch
    %122 = sbr.rel (%p120) target = $region25
  $region24: #{_lambda_.17} parent=0 // pred_region
    %v123 = vld [vmem:[#allocation2] sm:$0xff]
    %v124 = vld [vmem:[#allocation2 + $0x8] sm:$0x3]
    %v125 = vld [vmem:[%s2] sm:$0x1]
    %v127 = vlaneseq
    %v128 = vshrl.u32 %v127, 7
    %v129 = vsub.s32 0, %v128
    %v130 = vrot.slane %v125, %v129
    %v132 = vadd.f32 %v123, %v130
    %v133 = vadd.f32 %v124, %v130
    %v134 = vld [vmem:[%s3] sm:$0xff]
    %v135 = vld [vmem:[%s3 + $0x8] sm:$0x3]
    %v136 = vadd.f32 %v132, %v134
    %v137 = vadd.f32 %v133, %v135
    %138 = vst.msk [vmem:[%s4] sm:$0xff] %vm33, %v136
    %139 = vst.msk [vmem:[%s4 + $0x8] sm:$0x3] %vm118, %v137
  $region25: #{_lambda_.17} parent=0 // pred_fallthru
    _
  // Predicated region
  $region26: #{_lambda_.17} parent=0 // pred_check
    _
  $region27: #{_lambda_.17} parent=0 // pred_check_branch
    %141 = sbr.rel (0) target = $region29
  $region28: #{_lambda_.17} parent=0 // pred_region
    _
  $region29: #{_lambda_.17} parent=0 // pred_fallthru
    _
  // Predicated region
  $region30: #{_lambda_.17} parent=0 // pred_check
    _
  $region31: #{_lambda_.17} parent=0 // pred_check_branch
    %143 = sbr.rel (0) target = $region33
  $region32: #{_lambda_.17} parent=0 // pred_region
    _
  $region33: #{_lambda_.17} parent=0 // pred_fallthru
    _

// kernel: _lambda_.18
$region0: #{_lambda_.18}
  #allocation0 [shape = 'u32[]', space=smem, size = 0x4, offset = 0x4, fixed_abs, tag = 'smem constant byte address 0x4 - core index']
  #allocation1 [shape = 'u32[144,128]{1,0:T(1,128)}', space=vmem, size = 0x12000, scoped, tag = 'internal scratch']
  %s0 = inlined_call_operand.vmem [shape: f32[10,32], index: 0, kind: input, shape index: {}]
  %s1 = inlined_call_operand.vmem [shape: f32[1,32], index: 1, kind: input, shape index: {}]
  %s2 = inlined_call_operand.vmem [shape: f32[1,32], index: 2, kind: input, shape index: {}]
  %s3 = inlined_call_operand.vmem [shape: f32[32,128], index: 3, kind: input, shape index: {}]
  %s4 = inlined_call_operand.vmem [shape: f32[1,128], index: 4, kind: input, shape index: {}]
  %s5 = inlined_call_operand.vmem [shape: f32[10,128], index: 5, kind: output, shape index: {}]
  %s6 = sld [smem:[#allocation0]]
  $region30: #{_lambda_.18} parent=0
    _
  %s8 = ssub.s32 1, %s6
  %s9 = scalar_select 0, %s8, %s6
  // Predicated region
  $region2: #{_lambda_.18} parent=0 // pred_check
    _
  $region3: #{_lambda_.18} parent=0 // pred_check_branch
    %11 = sbr.rel (0) target = $region5
  $region4: #{_lambda_.18} parent=0 // pred_region
    _
  $region5: #{_lambda_.18} parent=0 // pred_fallthru
    _
  // Predicated region
  $region6: #{_lambda_.18} parent=0 // pred_check
    _
  $region7: #{_lambda_.18} parent=0 // pred_check_branch
    %13 = sbr.rel (0) target = $region9
  $region8: #{_lambda_.18} parent=0 // pred_region
    _
  $region9: #{_lambda_.18} parent=0 // pred_fallthru
    _
  // Predicated region
  $region10: #{_lambda_.18} parent=0 // pred_check
    _
  $region11: #{_lambda_.18} parent=0 // pred_check_branch
    %15 = sbr.rel (0) target = $region13
  $region12: #{_lambda_.18} parent=0 // pred_region
    _
  $region13: #{_lambda_.18} parent=0 // pred_fallthru
    _
  // Predicated region
  $region14: #{_lambda_.18} parent=0 // pred_check
    _
  $region15: #{_lambda_.18} parent=0 // pred_check_branch
    %17 = sbr.rel (0) target = $region17
  $region16: #{_lambda_.18} parent=0 // pred_region
    _
  $region17: #{_lambda_.18} parent=0 // pred_fallthru
    _
  // Predicated region
  $region18: #{_lambda_.18} parent=0 // pred_check
    _
  $region19: #{_lambda_.18} parent=0 // pred_check_branch
    %19 = sbr.rel (0) target = $region21
  $region20: #{_lambda_.18} parent=0 // pred_region
    _
  $region21: #{_lambda_.18} parent=0 // pred_fallthru
    _
  %v20 = vld [vmem:[%s0] sm:$0xff]
  %v21 = vld [vmem:[%s0 + $0x8] sm:$0x3]
  %vm22 = vcmask 261120
  %v23 = vsel %vm22, %v20, 0.0
  %24 = vadd.xlane.f32.xlu0 %v23
  %v25 = vpop.xlane.xlu0 %24
  %vm26 = vcmask 254976
  %v27 = vsel %vm26, %v21, 0.0
  %28 = vadd.xlane.f32.xlu0 %v27
  %v29 = vpop.xlane.xlu0 %28
  %v30 = vrcp.pop 32.0
  %v31 = vmul.f32 %v25, %v30
  %v32 = vmul.f32 %v29, %v30
  %v33 = vsub.f32 %v20, %v31
  %v34 = vsub.f32 %v21, %v32
  %v35 = vmul.f32 %v33, %v33
  %v36 = vmul.f32 %v34, %v34
  %v37 = vsel %vm22, %v35, 0.0
  %38 = vadd.xlane.f32.xlu0 %v37
  %v39 = vpop.xlane.xlu0 %38
  %v40 = vsel %vm26, %v36, 0.0
  %41 = vadd.xlane.f32.xlu0 %v40
  %v42 = vpop.xlane.xlu0 %41
  %v43 = vmul.f32 %v39, %v30
  %v44 = vmul.f32 %v42, %v30
  %v45 = vadd.f32 %v43, 1e-05
  %v46 = vadd.f32 %v44, 1e-05
  %v47 = vrsqrt.pop %v45
  %v48 = vrsqrt.pop %v46
  %v49 = vmul.f32 %v33, %v47
  %v50 = vmul.f32 %v34, %v48
  %v51 = vld [vmem:[%s1] sm:$0x1]
  %v53 = vlaneseq
  %v54 = vshrl.u32 %v53, 7
  %v55 = vsub.s32 0, %v54
  %v56 = vrot.slane %v51, %v55
  %v58 = vmul.f32 %v49, %v56
  %v59 = vmul.f32 %v50, %v56
  %v60 = vld [vmem:[%s2] sm:$0x1]
  %v62 = vlaneseq
  %v63 = vshrl.u32 %v62, 7
  %v64 = vsub.s32 0, %v63
  %v65 = vrot.slane %v60, %v64
  %v67 = vadd.f32 %v58, %v65
  %v68 = vadd.f32 %v59, %v65
  %v69 = vld [vmem:[%s3] sm:$0xff]
  %v70 = vld [vmem:[%s3 + $0x8] sm:$0xff]
  %v71 = vld [vmem:[%s3 + $0x10] sm:$0xff]
  %v72 = vld [vmem:[%s3 + $0x18] sm:$0xff]
  %v73 = vld [vmem:[%s4] sm:$0x1]
  %v75 = vlaneseq
  %v76 = vshrl.u32 %v75, 7
  %v77 = vsub.s32 0, %v76
  %v78 = vrot.slane %v73, %v77
  %v81 = vsel %vm22, %v67, 0
  %v84 = vsel %vm22, %v68, 0
  %86 = vmatprep.subr.mxu0 0.0
  %87 = vmatpush1.msra.mxu0 %v69
  %88 = vmatprep.subr.mxu0 0.0
  %89 = vmatpush1.msra.mxu0 %v70
  %90 = vmatprep.subr.mxu0 0.0
  %91 = vmatpush1.msra.mxu0 %v71
  %92 = vmatprep.subr.mxu0 0.0
  %93 = vmatpush1.msra.mxu0 %v72
  %94 = vmatprep.subr.mxu0 0.0
  %95 = vmatpush1.msra.mxu0 0.0
  %96 = vmatprep.subr.mxu0 0.0
  %97 = vmatpush1.msra.mxu0 0.0
  %98 = vmatprep.subr.mxu0 0.0
  %99 = vmatpush1.msra.mxu0 0.0
  %100 = vmatprep.subr.mxu0 0.0
  %101 = vmatpush1.msra.mxu0 0.0
  %102 = vmatprep.subr.mxu0 0.0
  %103 = vmatpush1.msra.mxu0 0.0
  %104 = vmatprep.subr.mxu0 0.0
  %105 = vmatpush1.msra.mxu0 0.0
  %106 = vmatprep.subr.mxu0 0.0
  %107 = vmatpush1.msra.mxu0 0.0
  %108 = vmatprep.subr.mxu0 0.0
  %109 = vmatpush1.msra.mxu0 0.0
  %110 = vmatprep.subr.mxu0 0.0
  %111 = vmatpush1.msra.mxu0 0.0
  %112 = vmatprep.subr.mxu0 0.0
  %113 = vmatpush1.msra.mxu0 0.0
  %114 = vmatprep.subr.mxu0 0.0
  %115 = vmatpush1.msra.mxu0 0.0
  %116 = vmatprep.subr.mxu0 0.0
  %117 = vmatpush1.msra.mxu0 0.0
  %118 = vmatprep.subr.mxu0 0.0
  %119 = vmatpush1.msra.mxu0 0.0
  %120 = vmatprep.subr.mxu0 0.0
  %121 = vmatpush1.msra.mxu0 0.0
  %122 = vmatprep.subr.mxu0 0.0
  %123 = vmatpush1.msra.mxu0 0.0
  %124 = vmatprep.subr.mxu0 0.0
  %125 = vmatpush1.msra.mxu0 0.0
  %126 = vmatprep.subr.mxu0 0.0
  %127 = vmatpush1.msra.mxu0 0.0
  %128 = vmatprep.subr.mxu0 0.0
  %129 = vmatpush1.msra.mxu0 0.0
  %130 = vmatprep.subr.mxu0 0.0
  %131 = vmatpush1.msra.mxu0 0.0
  %132 = vmatprep.subr.mxu0 0.0
  %133 = vmatpush1.msra.mxu0 0.0
  %134 = vmatprep.subr.mxu0 0.0
  %135 = vmatpush1.msra.mxu0 0.0
  %136 = vmatprep.subr.mxu0 0.0
  %137 = vmatpush1.msra.mxu0 0.0
  %138 = vmatprep.subr.mxu0 0.0
  %139 = vmatpush1.msra.mxu0 0.0
  %140 = vmatprep.subr.mxu0 0.0
  %141 = vmatpush1.msra.mxu0 0.0
  %142 = vmatprep.subr.mxu0 0.0
  %143 = vmatpush1.msra.mxu0 0.0
  %144 = vmatprep.subr.mxu0 0.0
  %145 = vmatpush1.msra.mxu0 0.0
  %146 = vmatprep.subr.mxu0 0.0
  %147 = vmatpush1.msra.mxu0 0.0
  %148 = vmatprep.subr.mxu0 0.0
  %149 = vmatpush1.msra.mxu0 0.0
  %150 = vmatprep.mubr.f32.mxu0 0.0
  %151 = vmatmul.mubr.f32.gmra.mrb[0].mxu0 %v81
  %v152 = vpop.f32.mrb[0].mxu0
  %v153 = vadd.f32 %v78, %v152
  %v154 = vpop.f32.mrb[0].mxu0
  %155 = vmatprep.mubr.f32.mxu0 0.0
  %156 = vmatmul.mubr.f32.gmra.mrb[0].mxu0 %v84
  %v157 = vpop.f32.mrb[0].mxu0
  %v158 = vadd.f32 %v78, %v157
  %v159 = vpop.f32.mrb[0].mxu0
  %160 = vdwg.mxu0
  %v161 = vmul.f32 %v153, 1.702
  %v162 = vmul.f32 %v158, 1.702
  %v163 = vxor.u32 %v161, 2147483648
  %v164 = vxor.u32 %v162, 2147483648
  %v165 = vmul.f32 %v163, 1.442695
  %v166 = vpow.pop %v165
  %v167 = vmul.f32 %v164, 1.442695
  %v168 = vpow.pop %v167
  %v169 = vadd.f32 %v166, 1.0
  %v170 = vadd.f32 %v168, 1.0
  %v171 = vrcp.pop %v169
  %v172 = vmul.f32 1.0, %v171
  %v173 = vrcp.pop %v170
  %v174 = vmul.f32 1.0, %v173
  %v175 = vmul.f32 %v153, %v172
  %v176 = vmul.f32 %v158, %v174
  %177 = vst [vmem:[%s5] sm:$0xff] %v175
  %178 = vst [vmem:[%s5 + $0x8] sm:$0x3] %v176
  // Predicated region
  $region22: #{_lambda_.18} parent=0 // pred_check
    _
  $region23: #{_lambda_.18} parent=0 // pred_check_branch
    %180 = sbr.rel (0) target = $region25
  $region24: #{_lambda_.18} parent=0 // pred_region
    _
  $region25: #{_lambda_.18} parent=0 // pred_fallthru
    _
  // Predicated region
  $region26: #{_lambda_.18} parent=0 // pred_check
    _
  $region27: #{_lambda_.18} parent=0 // pred_check_branch
    %182 = sbr.rel (0) target = $region29
  $region28: #{_lambda_.18} parent=0 // pred_region
    _
  $region29: #{_lambda_.18} parent=0 // pred_fallthru
    _

// kernel: _lambda_.19
$region0: #{_lambda_.19}
  #allocation0 [shape = 'u32[]', space=smem, size = 0x4, offset = 0x4, fixed_abs, tag = 'smem constant byte address 0x4 - core index']
  #allocation1 [shape = 'u32[144,128]{1,0:T(1,128)}', space=vmem, size = 0x12000, scoped, tag = 'internal scratch']
  #allocation2 [shape = 'f32[10,32]{1,0:T(8,128)}', space=vmem, size = 0x2000, scoped, tag = 'scratch operand']
  %s0 = inlined_call_operand.vmem [shape: f32[10,128], index: 0, kind: input, shape index: {}]
  %s1 = inlined_call_operand.vmem [shape: f32[128,32], index: 1, kind: input, shape index: {}]
  %s2 = inlined_call_operand.vmem [shape: f32[1,32], index: 2, kind: input, shape index: {}]
  %s3 = inlined_call_operand.vmem [shape: f32[10,32], index: 3, kind: input, shape index: {}]
  %s4 = inlined_call_operand.vmem [shape: f32[10,32], index: 4, kind: output, shape index: {}]
  %s5 = sld [smem:[#allocation0]]
  $region34: #{_lambda_.19} parent=0
    _
  %s7 = ssub.s32 1, %s5
  %s8 = scalar_select 0, %s7, %s5
  // Predicated region
  $region2: #{_lambda_.19} parent=0 // pred_check
    _
  $region3: #{_lambda_.19} parent=0 // pred_check_branch
    %10 = sbr.rel (0) target = $region5
  $region4: #{_lambda_.19} parent=0 // pred_region
    _
  $region5: #{_lambda_.19} parent=0 // pred_fallthru
    _
  // Predicated region
  $region6: #{_lambda_.19} parent=0 // pred_check
    _
  $region7: #{_lambda_.19} parent=0 // pred_check_branch
    %12 = sbr.rel (0) target = $region9
  $region8: #{_lambda_.19} parent=0 // pred_region
    _
  $region9: #{_lambda_.19} parent=0 // pred_fallthru
    _
  // Predicated region
  $region10: #{_lambda_.19} parent=0 // pred_check
    _
  $region11: #{_lambda_.19} parent=0 // pred_check_branch
    %14 = sbr.rel (0) target = $region13
  $region12: #{_lambda_.19} parent=0 // pred_region
    _
  $region13: #{_lambda_.19} parent=0 // pred_fallthru
    _
  // Predicated region
  $region14: #{_lambda_.19} parent=0 // pred_check
    _
  $region15: #{_lambda_.19} parent=0 // pred_check_branch
    %16 = sbr.rel (0) target = $region17
  $region16: #{_lambda_.19} parent=0 // pred_region
    _
  $region17: #{_lambda_.19} parent=0 // pred_fallthru
    _
  %p17 = scmp.eq.s32.totalorder 0, 0
  // Predicated region
  $region18: #{_lambda_.19} parent=0 // pred_check
    %p18 = pneg %p17
  $region19: #{_lambda_.19} parent=0 // pred_check_branch
    %20 = sbr.rel (%p18) target = $region21
  $region20: #{_lambda_.19} parent=0 // pred_region
    %vm21 = vcmask 261120
    %22 = vst.msk [vmem:[#allocation2] sm:$0xff] %vm21, 0.0
    %vm23 = vcmask 254976
    %24 = vst.msk [vmem:[#allocation2 + $0x8] sm:$0x3] %vm23, 0.0
  $region21: #{_lambda_.19} parent=0 // pred_fallthru
    _
  %v25 = vld [vmem:[#allocation2] sm:$0xff]
  %v26 = vld [vmem:[#allocation2 + $0x8] sm:$0x3]
  %v27 = vld [vmem:[%s0] sm:$0xff]
  %v28 = vld [vmem:[%s0 + $0x8] sm:$0x3]
  %v29 = vld [vmem:[%s1] sm:$0xff]
  %v30 = vld [vmem:[%s1 + $0x8] sm:$0xff]
  %v31 = vld [vmem:[%s1 + $0x10] sm:$0xff]
  %v32 = vld [vmem:[%s1 + $0x18] sm:$0xff]
  %v33 = vld [vmem:[%s1 + $0x20] sm:$0xff]
  %v34 = vld [vmem:[%s1 + $0x28] sm:$0xff]
  %v35 = vld [vmem:[%s1 + $0x30] sm:$0xff]
  %v36 = vld [vmem:[%s1 + $0x38] sm:$0xff]
  %v37 = vld [vmem:[%s1 + $0x40] sm:$0xff]
  %v38 = vld [vmem:[%s1 + $0x48] sm:$0xff]
  %v39 = vld [vmem:[%s1 + $0x50] sm:$0xff]
  %v40 = vld [vmem:[%s1 + $0x58] sm:$0xff]
  %v41 = vld [vmem:[%s1 + $0x60] sm:$0xff]
  %v42 = vld [vmem:[%s1 + $0x68] sm:$0xff]
  %v43 = vld [vmem:[%s1 + $0x70] sm:$0xff]
  %v44 = vld [vmem:[%s1 + $0x78] sm:$0xff]
  %45 = vmatprep.subr.mxu0 0.0
  %46 = vmatpush1.msra.mxu0 %v29
  %47 = vmatprep.subr.mxu0 0.0
  %48 = vmatpush1.msra.mxu0 %v30
  %49 = vmatprep.subr.mxu0 0.0
  %50 = vmatpush1.msra.mxu0 %v31
  %51 = vmatprep.subr.mxu0 0.0
  %52 = vmatpush1.msra.mxu0 %v32
  %53 = vmatprep.subr.mxu0 0.0
  %54 = vmatpush1.msra.mxu0 %v33
  %55 = vmatprep.subr.mxu0 0.0
  %56 = vmatpush1.msra.mxu0 %v34
  %57 = vmatprep.subr.mxu0 0.0
  %58 = vmatpush1.msra.mxu0 %v35
  %59 = vmatprep.subr.mxu0 0.0
  %60 = vmatpush1.msra.mxu0 %v36
  %61 = vmatprep.subr.mxu0 0.0
  %62 = vmatpush1.msra.mxu0 %v37
  %63 = vmatprep.subr.mxu0 0.0
  %64 = vmatpush1.msra.mxu0 %v38
  %65 = vmatprep.subr.mxu0 0.0
  %66 = vmatpush1.msra.mxu0 %v39
  %67 = vmatprep.subr.mxu0 0.0
  %68 = vmatpush1.msra.mxu0 %v40
  %69 = vmatprep.subr.mxu0 0.0
  %70 = vmatpush1.msra.mxu0 %v41
  %71 = vmatprep.subr.mxu0 0.0
  %72 = vmatpush1.msra.mxu0 %v42
  %73 = vmatprep.subr.mxu0 0.0
  %74 = vmatpush1.msra.mxu0 %v43
  %75 = vmatprep.subr.mxu0 0.0
  %76 = vmatpush1.msra.mxu0 %v44
  %77 = vmatprep.subr.mxu0 0.0
  %78 = vmatpush1.msra.mxu0 0.0
  %79 = vmatprep.subr.mxu0 0.0
  %80 = vmatpush1.msra.mxu0 0.0
  %81 = vmatprep.subr.mxu0 0.0
  %82 = vmatpush1.msra.mxu0 0.0
  %83 = vmatprep.subr.mxu0 0.0
  %84 = vmatpush1.msra.mxu0 0.0
  %85 = vmatprep.subr.mxu0 0.0
  %86 = vmatpush1.msra.mxu0 0.0
  %87 = vmatprep.subr.mxu0 0.0
  %88 = vmatpush1.msra.mxu0 0.0
  %89 = vmatprep.subr.mxu0 0.0
  %90 = vmatpush1.msra.mxu0 0.0
  %91 = vmatprep.subr.mxu0 0.0
  %92 = vmatpush1.msra.mxu0 0.0
  %93 = vmatprep.subr.mxu0 0.0
  %94 = vmatpush1.msra.mxu0 0.0
  %95 = vmatprep.subr.mxu0 0.0
  %96 = vmatpush1.msra.mxu0 0.0
  %97 = vmatprep.subr.mxu0 0.0
  %98 = vmatpush1.msra.mxu0 0.0
  %99 = vmatprep.subr.mxu0 0.0
  %100 = vmatpush1.msra.mxu0 0.0
  %101 = vmatprep.subr.mxu0 0.0
  %102 = vmatpush1.msra.mxu0 0.0
  %103 = vmatprep.subr.mxu0 0.0
  %104 = vmatpush1.msra.mxu0 0.0
  %105 = vmatprep.subr.mxu0 0.0
  %106 = vmatpush1.msra.mxu0 0.0
  %107 = vmatprep.subr.mxu0 0.0
  %108 = vmatpush1.msra.mxu0 0.0
  %109 = vmatprep.mubr.f32.mxu0 0.0
  %110 = vmatmul.mubr.f32.gmra.mrb[0].mxu0 %v27
  %v111 = vpop.f32.mrb[0].mxu0
  %v112 = vadd.f32 0.0, %v111
  %v113 = vpop.f32.mrb[0].mxu0
  %114 = vmatprep.mubr.f32.mxu0 0.0
  %115 = vmatmul.mubr.f32.gmra.mrb[0].mxu0 %v28
  %v116 = vpop.f32.mrb[0].mxu0
  %v117 = vadd.f32 0.0, %v116
  %v118 = vpop.f32.mrb[0].mxu0
  %119 = vdwg.mxu0
  %v120 = vadd.f32 %v25, %v112
  %v121 = vadd.f32 %v26, %v117
  %vm122 = vcmask 261120
  %123 = vst.msk [vmem:[#allocation2] sm:$0xff] %vm122, %v120
  %vm124 = vcmask 254976
  %125 = vst.msk [vmem:[#allocation2 + $0x8] sm:$0x3] %vm124, %v121
  // Predicated region
  $region22: #{_lambda_.19} parent=0 // pred_check
    %p126 = pneg %p17
  $region23: #{_lambda_.19} parent=0 // pred_check_branch
    %128 = sbr.rel (%p126) target = $region25
  $region24: #{_lambda_.19} parent=0 // pred_region
    %v129 = vld [vmem:[#allocation2] sm:$0xff]
    %v130 = vld [vmem:[#allocation2 + $0x8] sm:$0x3]
    %v131 = vld [vmem:[%s2] sm:$0x1]
    %v133 = vlaneseq
    %v134 = vshrl.u32 %v133, 7
    %v135 = vsub.s32 0, %v134
    %v136 = vrot.slane %v131, %v135
    %v138 = vadd.f32 %v129, %v136
    %v139 = vadd.f32 %v130, %v136
    %v140 = vld [vmem:[%s3] sm:$0xff]
    %v141 = vld [vmem:[%s3 + $0x8] sm:$0x3]
    %v142 = vadd.f32 %v138, %v140
    %v143 = vadd.f32 %v139, %v141
    %144 = vst.msk [vmem:[%s4] sm:$0xff] %vm122, %v142
    %145 = vst.msk [vmem:[%s4 + $0x8] sm:$0x3] %vm124, %v143
  $region25: #{_lambda_.19} parent=0 // pred_fallthru
    _
  // Predicated region
  $region26: #{_lambda_.19} parent=0 // pred_check
    _
  $region27: #{_lambda_.19} parent=0 // pred_check_branch
    %147 = sbr.rel (0) target = $region29
  $region28: #{_lambda_.19} parent=0 // pred_region
    _
  $region29: #{_lambda_.19} parent=0 // pred_fallthru
    _
  // Predicated region
  $region30: #{_lambda_.19} parent=0 // pred_check
    _
  $region31: #{_lambda_.19} parent=0 // pred_check_branch
    %149 = sbr.rel (0) target = $region33
  $region32: #{_lambda_.19} parent=0 // pred_region
    _
  $region33: #{_lambda_.19} parent=0 // pred_fallthru
    _

// kernel: _lambda_.25
$region0: #{_lambda_.25}
  #allocation0 [shape = 'u32[]', space=smem, size = 0x4, offset = 0x4, fixed_abs, tag = 'smem constant byte address 0x4 - core index']
  #allocation1 [shape = 'u32[144,128]{1,0:T(1,128)}', space=vmem, size = 0x12000, scoped, tag = 'internal scratch']
  %s0 = inlined_call_operand.vmem [shape: f32[8,32], index: 0, kind: input, shape index: {}]
  %s1 = inlined_call_operand.vmem [shape: f32[1,32], index: 1, kind: input, shape index: {}]
  %s2 = inlined_call_operand.vmem [shape: f32[1,32], index: 2, kind: input, shape index: {}]
  %s3 = inlined_call_operand.hbm [shape: f32[8,32], index: 3, kind: output, shape index: {}]
  %s4 = sld [smem:[#allocation0]]
  $region22: #{_lambda_.25} parent=0
    _
  %s6 = ssub.s32 1, %s4
  %s7 = scalar_select 0, %s6, %s4
  $region1: #{_lambda_.25} parent=0
    #allocation2 [shape = 'u8[4096]{0}', space=vmem, size = 0x1000, scoped, tag = 'output window, operand 0, single buffered']
    #allocation3 [shape = 's32[1]{0}', space=sflag, size = 0x4, scoped, tag = 'scoped memory for _lambda_.25']
    %8 = vsyncpa [#allocation3], 0
    // Predicated region
    $region2: #{_lambda_.25} parent=1 // pred_check
      _
    $region3: #{_lambda_.25} parent=1 // pred_check_branch
      %10 = sbr.rel (0) target = $region5
    $region4: #{_lambda_.25} parent=1 // pred_region
      _
    $region5: #{_lambda_.25} parent=1 // pred_fallthru
      _
    // Predicated region
    $region6: #{_lambda_.25} parent=1 // pred_check
      _
    $region7: #{_lambda_.25} parent=1 // pred_check_branch
      %12 = sbr.rel (0) target = $region9
    $region8: #{_lambda_.25} parent=1 // pred_region
      _
    $region9: #{_lambda_.25} parent=1 // pred_fallthru
      _
    // Predicated region
    $region10: #{_lambda_.25} parent=1 // pred_check
      _
    $region11: #{_lambda_.25} parent=1 // pred_check_branch
      %14 = sbr.rel (0) target = $region13
    $region12: #{_lambda_.25} parent=1 // pred_region
      _
    $region13: #{_lambda_.25} parent=1 // pred_fallthru
      _
    %v15 = vld [vmem:[%s0] sm:$0xff]
    %vm16 = vcmask 261120
    %v17 = vsel %vm16, %v15, 0.0
    %18 = vadd.xlane.f32.xlu0 %v17
    %v19 = vpop.xlane.xlu0 %18
    %v20 = vrcp.pop 32.0
    %v21 = vmul.f32 %v19, %v20
    %v22 = vsub.f32 %v15, %v21
    %v23 = vmul.f32 %v22, %v22
    %v24 = vsel %vm16, %v23, 0.0
    %25 = vadd.xlane.f32.xlu0 %v24
    %v26 = vpop.xlane.xlu0 %25
    %v27 = vmul.f32 %v26, %v20
    %v28 = vadd.f32 %v27, 1e-05
    %v29 = vrsqrt.pop %v28
    %v30 = vmul.f32 %v22, %v29
    %v31 = vld [vmem:[%s1] sm:$0x1]
    %v33 = vlaneseq
    %v34 = vshrl.u32 %v33, 7
    %v35 = vsub.s32 0, %v34
    %v36 = vrot.slane %v31, %v35
    %v38 = vmul.f32 %v30, %v36
    %v39 = vld [vmem:[%s2] sm:$0x1]
    %v41 = vlaneseq
    %v42 = vshrl.u32 %v41, 7
    %v43 = vsub.s32 0, %v42
    %v44 = vrot.slane %v39, %v43
    %v46 = vadd.f32 %v38, %v44
    %47 = vst.msk [vmem:[#allocation2] sm:$0xff] %vm16, %v46
    // Predicated region
    $region14: #{_lambda_.25} parent=1 // pred_check
      _
    $region15: #{_lambda_.25} parent=1 // pred_check_branch
      %49 = sbr.rel (0) target = $region17
    $region16: #{_lambda_.25} parent=1 // pred_region
      %s51 = ssub.s32 128, 128
      %52 = vsyncadd [#allocation3], %s51
      %s54 = sshll.u32 [#allocation2], 4
      %s55 = int_to_ptr.vmem [resolvable:$true] %s54
      %57 = dma.vmem_to_hbm [thread:$0]  %s55, 128, %s3, [#allocation3]
    $region17: #{_lambda_.25} parent=1 // pred_fallthru
      _
    // Predicated region
    $region18: #{_lambda_.25} parent=1 // pred_check
      _
    $region19: #{_lambda_.25} parent=1 // pred_check_branch
      %59 = sbr.rel (0) target = $region21
    $region20: #{_lambda_.25} parent=1 // pred_region
      %60 = dma.done [#allocation3], 128
    $region21: #{_lambda_.25} parent=1 // pred_fallthru
      _
    %61 = vsyncpa [#allocation3], 1

</llo_original>
